<compile_context>
chip_gen: v7x
topology: tpu7x:2x2x1
jax: 0.10.0
libtpu: 0.0.40
codegen_flags: <defaults>
</compile_context>

<pallas_src>
import functools

import jax
import jax.numpy as jnp
from jax.experimental import pallas as pl
from jax.experimental.pallas import tpu as pltpu

NEG_INF = -1e30
LEAKY_SLOPE = 0.01  # torch F.leaky_relu default


def _gat_kernel(y_ref, s_src_ref, s_dst_ref, adj_t_ref, out_ref, *, d_out):
    """One grid step handles one block of Tv destination nodes.

    y_ref     : (N_pad, D_pad) f32   [z | ones | 0-pad]  (grid-invariant)
    s_src_ref : (1, N_pad)     f32   source attention scores, lane-major
    s_dst_ref : (Tv, 1)        f32   destination attention scores, this block
    adj_t_ref : (Tv, N_pad)    int8  adj_t[v, u] = 1 iff edge u -> v
    out_ref   : (Tv, D_pad)    f32   padded output block
    """
    # Edge logits in (dst, src) layout: broadcast-add + leaky_relu (VPU only).
    e = s_dst_ref[...] + s_src_ref[...]                      # (Tv, N_pad)
    e = jnp.where(e > 0, e, LEAKY_SLOPE * e)

    # Single mask select; exp of masked logits underflows to exactly 0.
    e = jnp.where(adj_t_ref[...] != 0, e, NEG_INF)
    m = jnp.max(e, axis=-1, keepdims=True)                   # (Tv, 1)   XLU
    p = jnp.exp(e - m)                                       # (Tv, N_pad) EUP

    # Un-normalized aggregation on the MXU.  The all-ones column of y yields
    # the softmax denominator for free (no separate lane-axis reduction).
    acc = jnp.dot(p, y_ref[...], preferred_element_type=jnp.float32)  # (Tv, D_pad)
    denom = acc[:, d_out:d_out + 1]                          # (Tv, 1)
    inv = pl.reciprocal(jnp.maximum(denom, 1e-30), approx=False)      # exact
    out_ref[...] = acc * inv


def _physical_vmem_bytes():
    """Physical VMEM per TensorCore; conservative (v7x-sized) default."""
    try:
        return int(pltpu.get_tpu_info().vmem_capacity_bytes)
    except Exception:
        return 64 * 1024 * 1024


def gat_forward(h, w_fc_t, a_src, a_dst, adj, *, tv=128):
    """GAT layer forward.

    h      : (N, D_in)     node features
    w_fc_t : (D_in, D_out) fc weight, transposed
    a_src  : (D_out,)      attention weights for the source half of [z_u || z_v]
    a_dst  : (D_out,)      attention weights for the destination half
    adj    : (N, N)        adj[u, v] != 0 iff edge u -> v (bool / float / int)

    Note: tv=256 is a good choice on v5e/v6e (128 MiB VMEM) for larger graphs.
    """
    n, _ = h.shape
    d_out = w_fc_t.shape[1]

    d_pad = ((d_out + 1 + 127) // 128) * 128          # z columns + ones column
    n_pad = ((n + tv - 1) // tv) * tv

    f32 = jnp.float32
    hp = jax.lax.Precision.HIGHEST
    h = jnp.asarray(h, f32)
    w_fc_t = jnp.asarray(w_fc_t, f32)
    a_src = jnp.asarray(a_src, f32).reshape(-1)
    a_dst = jnp.asarray(a_dst, f32).reshape(-1)

    # ---- hoisted projection + attention scores (plain XLA matmuls) --------
    z = jnp.dot(h, w_fc_t, precision=hp)              # (N, D_out)
    s_src = jnp.dot(z, a_src, precision=hp)           # (N,)
    s_dst = jnp.dot(z, a_dst, precision=hp)           # (N,)

    # y = [z | 1 | 0-pad].  Padded source rows only contribute via p = 0.
    y_pad = jnp.zeros((n_pad, d_pad), f32)
    y_pad = y_pad.at[:n, :d_out].set(z)
    y_pad = y_pad.at[:, d_out].set(1.0)

    s_src_row = jnp.zeros((1, n_pad), f32).at[0, :n].set(s_src)    # lane-major
    s_dst_col = jnp.zeros((n_pad, 1), f32).at[:n, 0].set(s_dst)

    # Transposed int8 adjacency (dst-major): adj_t[v, u] = 1 iff edge u -> v.
    # Padded nodes have no edges, so they cannot affect real nodes.
    adj_t = jnp.zeros((n_pad, n_pad), jnp.int8).at[:n, :n].set(
        jnp.asarray(adj).T.astype(jnp.int8))

    # ---- VMEM budget: per-generation cap from hardware query ---------------
    phys = _physical_vmem_bytes()
    cap = min(int(phys * 0.85), 110 * 1024 * 1024)    # ~54 MiB v7x, ~108 MiB v5e/v6e
    resident = (n_pad * d_pad + n_pad) * 4            # y + s_src
    streamed = 2 * (tv * n_pad * 1 + tv * 4 + tv * d_pad * 4)  # adj, s_dst, out (x2)
    temporaries = 3 * tv * n_pad * 4                  # e, p, compare mask
    need = 2 * resident + streamed + temporaries + (4 << 20)
    vmem_limit = int(min(max(need, 16 << 20), cap))

    kernel = functools.partial(_gat_kernel, d_out=d_out)

    def build(single_buffer_invariants):
        # Grid-invariant blocks (index_map always (0, 0)) don't need double
        # buffering; requesting 1 buffer halves their VMEM footprint.
        inv_kw = (dict(pipeline_mode=pl.Buffered(1))
                  if single_buffer_invariants else {})
        return pl.pallas_call(
            kernel,
            out_shape=jax.ShapeDtypeStruct((n_pad, d_pad), f32),
            grid=(n_pad // tv,),
            in_specs=[
                pl.BlockSpec((n_pad, d_pad), lambda i: (0, 0), **inv_kw),  # y
                pl.BlockSpec((1, n_pad), lambda i: (0, 0), **inv_kw),      # s_src
                pl.BlockSpec((tv, 1), lambda i: (i, 0)),                   # s_dst block
                pl.BlockSpec((tv, n_pad), lambda i: (i, 0)),               # adj^T block
            ],
            out_specs=pl.BlockSpec((tv, d_pad), lambda i: (i, 0)),
            compiler_params=pltpu.CompilerParams(
                dimension_semantics=("parallel",),      # megacore sharding on v7x
                vmem_limit_bytes=vmem_limit,
            ),
        )

    try:
        out_pad = jax.block_until_ready(
            build(True)(y_pad, s_src_row, s_dst_col, adj_t))
    except Exception:
        # This Pallas version rejects buffer_count=1; default double-buffered
        # specs are semantically identical.
        out_pad = build(False)(y_pad, s_src_row, s_dst_col, adj_t)

    return out_pad[:n, :d_out]


def reference(h, w_fc_t, a_src, a_dst, adj):
    """Pure-JAX reference matching the PyTorch/DGL module (dense adjacency)."""
    z = h @ w_fc_t
    s_src = z @ a_src.reshape(-1, 1)          # (N, 1)
    s_dst = z @ a_dst.reshape(-1, 1)          # (N, 1)
    e = s_src + s_dst.T                       # e[u, v] for edge u -> v
    e = jnp.where(e > 0, e, LEAKY_SLOPE * e)
    mask = jnp.asarray(adj).astype(bool)
    e = jnp.where(mask, e, NEG_INF)
    m = jnp.max(e, axis=0, keepdims=True)
    p = jnp.where(mask, jnp.exp(e - m), 0.0)
    alpha = p / p.sum(0, keepdims=True)
    return alpha.T @ z


if __name__ == "__main__":
    key = jax.random.PRNGKey(0)
    # Module defaults: in_dim=300, out_dim=10.  Small graph, multiple dst blocks.
    N, D_IN, D_OUT = 200, 300, 10

    k_h, k_fc, k_attn, k_adj = jax.random.split(key, 4)

    # Node features
    h = jax.random.normal(k_h, (N, D_IN), dtype=jnp.float32)

    # fc: Linear(in_dim, out_dim, bias=False), xavier_normal_ with gain('relu')=sqrt(2)
    gain = 2.0 ** 0.5
    std_fc = gain * (2.0 / (D_IN + D_OUT)) ** 0.5
    w_fc = jax.random.normal(k_fc, (D_OUT, D_IN), dtype=jnp.float32) * std_fc
    w_fc_t = w_fc.T  # (D_IN, D_OUT)

    # attn_fc: Linear(2*out_dim, 1, bias=False), xavier_normal_ with same gain
    std_attn = gain * (2.0 / (1 + 2 * D_OUT)) ** 0.5
    a_vec = jax.random.normal(k_attn, (2 * D_OUT,), dtype=jnp.float32) * std_attn
    a_src = a_vec[:D_OUT]   # multiplies z_src (edges.src['z'])
    a_dst = a_vec[D_OUT:]   # multiplies z_dst (edges.dst['z'])

    # Random adjacency with guaranteed self-loops (every node has >= 1 in-edge)
    rand_adj = jax.random.uniform(k_adj, (N, N)) < 0.05
    adj = jnp.logical_or(rand_adj, jnp.eye(N, dtype=bool))  # adj[u, v]: edge u -> v

    out = gat_forward(h, w_fc_t, a_src, a_dst, adj)
    out = jax.block_until_ready(out)

    with jax.default_matmul_precision("highest"):
        ref = reference(h, w_fc_t, a_src, a_dst, adj)
    ref = jax.block_until_ready(ref)

    max_err = jnp.max(jnp.abs(out - ref))
    assert jnp.allclose(out, ref, atol=1e-4, rtol=1e-4), (
        f"mismatch vs reference, max abs err = {max_err}")

    print("KERNEL_OK")
</pallas_src>

<mosaic_0001>
module attributes {stable_mosaic.version = 11 : i64} {
  func.func @_gat_kernel(%arg0: i32, %arg1: memref<256x128xf32, #tpu.memory_space<vmem>>, %arg2: memref<1x256xf32, #tpu.memory_space<vmem>>, %arg3: memref<128x1xf32, #tpu.memory_space<vmem>>, %arg4: memref<128x256xi8, #tpu.memory_space<vmem>>, %arg5: memref<128x128xf32, #tpu.memory_space<vmem>>) attributes {dimension_semantics = [#tpu.dimension_semantics<parallel>], iteration_bounds = array<i64: 2>, scalar_prefetch = 0 : i64, scratch_operands = 0 : i64, tpu.core_type = #tpu.core_type<tc>, window_params = [{pipeline_mode = #tpu.pipeline_mode<synchronous>, transform_indices = @transform_0, window_bounds = array<i64: 256, 128>}, {pipeline_mode = #tpu.pipeline_mode<synchronous>, transform_indices = @transform_1, window_bounds = array<i64: 1, 256>}, {transform_indices = @transform_2, window_bounds = array<i64: 128, 1>}, {transform_indices = @transform_3, window_bounds = array<i64: 128, 256>}, {transform_indices = @transform_4, window_bounds = array<i64: 128, 128>}]} {
    %c0 = arith.constant 0 : index
    %c0_0 = arith.constant 0 : index
    %0 = vector.load %arg3[%c0, %c0_0] : memref<128x1xf32, #tpu.memory_space<vmem>>, vector<128x1xf32>
    %c0_1 = arith.constant 0 : index
    %c0_2 = arith.constant 0 : index
    %1 = vector.load %arg2[%c0_1, %c0_2] : memref<1x256xf32, #tpu.memory_space<vmem>>, vector<1x256xf32>
    %2 = vector.broadcast %0 : vector<128x1xf32> to vector<128x256xf32>
    %3 = vector.broadcast %1 : vector<1x256xf32> to vector<128x256xf32>
    %4 = arith.addf %2, %3 : vector<128x256xf32>
    %cst = arith.constant 0.000000e+00 : f32
    %5 = vector.broadcast %cst : f32 to vector<128x256xf32>
    %6 = arith.cmpf ogt, %4, %5 : vector<128x256xf32>
    %cst_3 = arith.constant 0.00999999977 : f32
    %7 = vector.broadcast %cst_3 : f32 to vector<128x256xf32>
    %8 = arith.mulf %7, %4 : vector<128x256xf32>
    %9 = arith.select %6, %4, %8 : vector<128x256xi1>, vector<128x256xf32>
    %c0_4 = arith.constant 0 : index
    %c0_5 = arith.constant 0 : index
    %10 = vector.load %arg4[%c0_4, %c0_5] : memref<128x256xi8, #tpu.memory_space<vmem>>, vector<128x256xi8>
    %c0_i8 = arith.constant 0 : i8
    %11 = vector.broadcast %c0_i8 : i8 to vector<128x256xi8>
    %12 = arith.cmpi ne, %10, %11 : vector<128x256xi8>
    %cst_6 = arith.constant -1.000000e+30 : f32
    %13 = vector.broadcast %cst_6 : f32 to vector<128x256xf32>
    %14 = arith.select %12, %9, %13 : vector<128x256xi1>, vector<128x256xf32>
    %cst_7 = arith.constant dense<0xFF800000> : vector<128xf32>
    %15 = vector.multi_reduction <maximumf>, %14, %cst_7 [1] : vector<128x256xf32> to vector<128xf32>
    %16 = vector.shape_cast %15 : vector<128xf32> to vector<128x1xf32>
    %17 = vector.broadcast %16 : vector<128x1xf32> to vector<128x256xf32>
    %18 = arith.subf %14, %17 : vector<128x256xf32>
    %19 = math.exp %18 : vector<128x256xf32>
    %c0_8 = arith.constant 0 : index
    %c0_9 = arith.constant 0 : index
    %20 = vector.load %arg1[%c0_8, %c0_9] : memref<256x128xf32, #tpu.memory_space<vmem>>, vector<256x128xf32>
    %cst_10 = arith.constant dense<0.000000e+00> : vector<128x128xf32>
    %21 = tpu.matmul %19, %20, %cst_10 {dimension_numbers = #tpu.dot_dimension_numbers<[1], [0], [0], [1], [0, 0, 1, 1], [], []>} : vector<128x256xf32>, vector<256x128xf32>, vector<128x128xf32> -> vector<128x128xf32>
    %22 = vector.extract_strided_slice %21 {offsets = [0, 10], sizes = [128, 1], strides = [1, 1]} : vector<128x128xf32> to vector<128x1xf32>
    %cst_11 = arith.constant 1.000000e-30 : f32
    %23 = vector.broadcast %cst_11 : f32 to vector<128x1xf32>
    %24 = arith.maximumf %22, %23 : vector<128x1xf32>
    %25 = tpu.reciprocal %24 : vector<128x1xf32> -> vector<128x1xf32>
    %26 = vector.broadcast %25 : vector<128x1xf32> to vector<128x128xf32>
    %27 = arith.mulf %21, %26 : vector<128x128xf32>
    %c0_12 = arith.constant 0 : index
    %c0_13 = arith.constant 0 : index
    %28 = vector.load %arg5[%c0_12, %c0_13] : memref<128x128xf32, #tpu.memory_space<vmem>>, vector<128x128xf32>
    tpu.vector_store %arg5[%c0_12, %c0_13], %27 {strides = array<i32>} : memref<128x128xf32, #tpu.memory_space<vmem>>, vector<128x128xf32>,
    return
  }
  func.func @transform_0(%arg0: i32) -> (i32, i32) {
    %c0_i32 = arith.constant 0 : i32
    %c0_i32_0 = arith.constant 0 : i32
    %c0_i32_1 = arith.constant 0 : i32
    return %c0_i32, %c0_i32_0 : i32, i32
  }
  func.func @transform_1(%arg0: i32) -> (i32, i32) {
    %c0_i32 = arith.constant 0 : i32
    %c0_i32_0 = arith.constant 0 : i32
    %c0_i32_1 = arith.constant 0 : i32
    return %c0_i32, %c0_i32_0 : i32, i32
  }
  func.func @transform_2(%arg0: i32) -> (i32, i32) {
    %c0_i32 = arith.constant 0 : i32
    %c0_i32_0 = arith.constant 0 : i32
    return %arg0, %c0_i32 : i32, i32
  }
  func.func @transform_3(%arg0: i32) -> (i32, i32) {
    %c0_i32 = arith.constant 0 : i32
    %c0_i32_0 = arith.constant 0 : i32
    return %arg0, %c0_i32 : i32, i32
  }
  func.func @transform_4(%arg0: i32) -> (i32, i32) {
    %c0_i32 = arith.constant 0 : i32
    %c0_i32_0 = arith.constant 0 : i32
    return %arg0, %c0_i32 : i32, i32
  }
}

module attributes {stable_mosaic.version = 11 : i64} {
  func.func @_gat_kernel(%arg0: i32, %arg1: memref<256x128xf32, #tpu.memory_space<vmem>>, %arg2: memref<1x256xf32, #tpu.memory_space<vmem>>, %arg3: memref<128x1xf32, #tpu.memory_space<vmem>>, %arg4: memref<128x256xi8, #tpu.memory_space<vmem>>, %arg5: memref<128x128xf32, #tpu.memory_space<vmem>>) attributes {dimension_semantics = [#tpu.dimension_semantics<parallel>], iteration_bounds = array<i64: 2>, scalar_prefetch = 0 : i64, scratch_operands = 0 : i64, tpu.core_type = #tpu.core_type<tc>, window_params = [{pipeline_mode = #tpu.pipeline_mode<synchronous>, transform_indices = @transform_0, window_bounds = array<i64: 256, 128>}, {pipeline_mode = #tpu.pipeline_mode<synchronous>, transform_indices = @transform_1, window_bounds = array<i64: 1, 256>}, {transform_indices = @transform_2, window_bounds = array<i64: 128, 1>}, {transform_indices = @transform_3, window_bounds = array<i64: 128, 256>}, {transform_indices = @transform_4, window_bounds = array<i64: 128, 128>}]} {
    %c0 = arith.constant 0 : index
    %c0_0 = arith.constant 0 : index
    %0 = vector.load %arg3[%c0, %c0_0] : memref<128x1xf32, #tpu.memory_space<vmem>>, vector<128x1xf32>
    %c0_1 = arith.constant 0 : index
    %c0_2 = arith.constant 0 : index
    %1 = vector.load %arg2[%c0_1, %c0_2] : memref<1x256xf32, #tpu.memory_space<vmem>>, vector<1x256xf32>
    %2 = vector.broadcast %0 : vector<128x1xf32> to vector<128x256xf32>
    %3 = vector.broadcast %1 : vector<1x256xf32> to vector<128x256xf32>
    %4 = arith.addf %2, %3 : vector<128x256xf32>
    %cst = arith.constant 0.000000e+00 : f32
    %5 = vector.broadcast %cst : f32 to vector<128x256xf32>
    %6 = arith.cmpf ogt, %4, %5 : vector<128x256xf32>
    %cst_3 = arith.constant 0.00999999977 : f32
    %7 = vector.broadcast %cst_3 : f32 to vector<128x256xf32>
    %8 = arith.mulf %7, %4 : vector<128x256xf32>
    %9 = arith.select %6, %4, %8 : vector<128x256xi1>, vector<128x256xf32>
    %c0_4 = arith.constant 0 : index
    %c0_5 = arith.constant 0 : index
    %10 = vector.load %arg4[%c0_4, %c0_5] : memref<128x256xi8, #tpu.memory_space<vmem>>, vector<128x256xi8>
    %c0_i8 = arith.constant 0 : i8
    %11 = vector.broadcast %c0_i8 : i8 to vector<128x256xi8>
    %12 = arith.cmpi ne, %10, %11 : vector<128x256xi8>
    %cst_6 = arith.constant -1.000000e+30 : f32
    %13 = vector.broadcast %cst_6 : f32 to vector<128x256xf32>
    %14 = arith.select %12, %9, %13 : vector<128x256xi1>, vector<128x256xf32>
    %cst_7 = arith.constant dense<0xFF800000> : vector<128xf32>
    %15 = vector.multi_reduction <maximumf>, %14, %cst_7 [1] : vector<128x256xf32> to vector<128xf32>
    %16 = vector.shape_cast %15 : vector<128xf32> to vector<128x1xf32>
    %17 = vector.broadcast %16 : vector<128x1xf32> to vector<128x256xf32>
    %18 = arith.subf %14, %17 : vector<128x256xf32>
    %19 = math.exp %18 : vector<128x256xf32>
    %c0_8 = arith.constant 0 : index
    %c0_9 = arith.constant 0 : index
    %20 = vector.load %arg1[%c0_8, %c0_9] : memref<256x128xf32, #tpu.memory_space<vmem>>, vector<256x128xf32>
    %cst_10 = arith.constant dense<0.000000e+00> : vector<128x128xf32>
    %21 = tpu.matmul %19, %20, %cst_10 {dimension_numbers = #tpu.dot_dimension_numbers<[1], [0], [0], [1], [0, 0, 1, 1], [], []>} : vector<128x256xf32>, vector<256x128xf32>, vector<128x128xf32> -> vector<128x128xf32>
    %22 = vector.extract_strided_slice %21 {offsets = [0, 10], sizes = [128, 1], strides = [1, 1]} : vector<128x128xf32> to vector<128x1xf32>
    %cst_11 = arith.constant 1.000000e-30 : f32
    %23 = vector.broadcast %cst_11 : f32 to vector<128x1xf32>
    %24 = arith.maximumf %22, %23 : vector<128x1xf32>
    %25 = tpu.reciprocal %24 : vector<128x1xf32> -> vector<128x1xf32>
    %26 = vector.broadcast %25 : vector<128x1xf32> to vector<128x128xf32>
    %27 = arith.mulf %21, %26 : vector<128x128xf32>
    %c0_12 = arith.constant 0 : index
    %c0_13 = arith.constant 0 : index
    %28 = vector.load %arg5[%c0_12, %c0_13] : memref<128x128xf32, #tpu.memory_space<vmem>>, vector<128x128xf32>
    tpu.vector_store %arg5[%c0_12, %c0_13], %27 {strides = array<i32>} : memref<128x128xf32, #tpu.memory_space<vmem>>, vector<128x128xf32>,
    return
  }
  func.func @transform_0(%arg0: i32) -> (i32, i32) {
    %c0_i32 = arith.constant 0 : i32
    %c0_i32_0 = arith.constant 0 : i32
    %c0_i32_1 = arith.constant 0 : i32
    return %c0_i32, %c0_i32_0 : i32, i32
  }
  func.func @transform_1(%arg0: i32) -> (i32, i32) {
    %c0_i32 = arith.constant 0 : i32
    %c0_i32_0 = arith.constant 0 : i32
    %c0_i32_1 = arith.constant 0 : i32
    return %c0_i32, %c0_i32_0 : i32, i32
  }
  func.func @transform_2(%arg0: i32) -> (i32, i32) {
    %c0_i32 = arith.constant 0 : i32
    %c0_i32_0 = arith.constant 0 : i32
    return %arg0, %c0_i32 : i32, i32
  }
  func.func @transform_3(%arg0: i32) -> (i32, i32) {
    %c0_i32 = arith.constant 0 : i32
    %c0_i32_0 = arith.constant 0 : i32
    return %arg0, %c0_i32 : i32, i32
  }
  func.func @transform_4(%arg0: i32) -> (i32, i32) {
    %c0_i32 = arith.constant 0 : i32
    %c0_i32_0 = arith.constant 0 : i32
    return %arg0, %c0_i32 : i32, i32
  }
}

</mosaic_0001>

<llo_original>
// kernel: tpu_custom_call.1
$region0: #{tpu_custom_call.1}
  #allocation0 [shape = 'u32[]', space=smem, size = 0x4, offset = 0x4, fixed_abs, tag = 'smem constant byte address 0x4 - core index']
  #allocation1 [shape = 'u32[144,128]{1,0:T(1,128)}', space=vmem, size = 0x12000, scoped, tag = 'internal scratch']
  %s0 = inlined_call_operand.vmem [shape: f32[256,128], index: 0, kind: input, shape index: {}]
  %s1 = inlined_call_operand.vmem [shape: f32[1,256], index: 1, kind: input, shape index: {}]
  %s2 = inlined_call_operand.vmem [shape: f32[256,1], index: 2, kind: input, shape index: {}]
  %s3 = inlined_call_operand.hbm [shape: s8[256,256], index: 3, kind: input, shape index: {}]
  %s4 = inlined_call_operand.hbm [shape: f32[256,128], index: 4, kind: output, shape index: {}]
  %s5 = sld [smem:[#allocation0]]
  $region53: #{tpu_custom_call.1} parent=0
    _
  %s7 = ssub.s32 1, %s5
  %s8 = scalar_select 0, %s7, %s5
  $region1: #{tpu_custom_call.1} parent=0
    #allocation2 [shape = 'u8[65536]{0}', space=vmem, size = 0x10000, scoped, tag = 'input window, operand 3']
    #allocation3 [shape = 's32[2]{0}', space=sflag, size = 0x8, scoped, tag = 'scoped memory for tpu_custom_call.1']
    #allocation4 [shape = 's32[2]{0}', space=sflag, size = 0x8, scoped, tag = 'scoped memory for tpu_custom_call.1']
    #allocation5 [shape = 'u8[131072]{0}', space=vmem, size = 0x20000, scoped, tag = 'output window, operand 0']
    %9 = vsyncpa [#allocation3], 0
    %s10 = scalar_lea.sflag [#allocation3], 1
    %11 = vsyncpa %s10, 0
    %12 = vsyncpa [#allocation4], 0
    %s13 = scalar_lea.sflag [#allocation4], 1
    %14 = vsyncpa %s13, 0
    loop: start=0, step=1, limit=4
    $region2: #{tpu_custom_call.1} parent=1 // loop_pre_header
      _
    $region3: #{tpu_custom_call.1} parent=1 // loop_header
      %s16 = sphi 0, %s20
      %p17 = scmp.ge.s32.totalorder %s16, 4
      %s24 = sphi 0, %s24
      %s26 = sphi 0, %s24
      %s27 = sphi 0, %s26
      %s41 = sphi 0, %s27
      %s45 = sphi 0, %s45
      %s47 = sphi 0, %s45
      %s48 = sphi 0, %s47
      %s62 = sphi 0, %s48
      %s68 = sphi 0, %s70
      %s71 = sphi 0, %s68
      %s72 = sphi 0, %s71
      %s88 = sphi 0, %s72
      %s94 = sphi 0, %s96
      %s97 = sphi 0, %s94
      %s98 = sphi 0, %s97
      %s114 = sphi 0, %s98
      %s120 = sphi 0, %s122
      %s123 = sphi 0, %s120
      %s124 = sphi 0, %s123
      %s140 = sphi 0, %s124
    $region4: #{tpu_custom_call.1} parent=1 // loop_header_branch
      %19 = sbr.rel (%p17) target = $region8
    $region5: #{tpu_custom_call.1} parent=1 // loop_body
      %s21 = ssub.s32 %s16, 1
      %s22 = ssub.s32 %s16, 2
      %s23 = sadd.s32 %s16, 1
      %s25 = sadd.s32 %s24, 1
      %p28 = scmp.eq.s32.totalorder %s16, 1
      %p29 = scmp.ne.s32.totalorder %s24, %s26
      %p30 = scmp.eq.s32.totalorder %s16, 0
      %p31 = por %p29, %p30
      %p32 = scmp.ne.s32.totalorder %s24, %s26
      %p33 = scmp.eq.s32.totalorder %s21, 1
      %p34 = por %p32, %p33
      %p35 = scmp.ne.s32.totalorder %s26, %s27
      %p36 = scmp.eq.s32.totalorder %s21, 0
      %p37 = por %p35, %p36
      %p38 = scmp.ne.s32.totalorder %s26, %s27
      %p39 = scmp.eq.s32.totalorder %s22, 1
      %p40 = por %p38, %p39
      %p42 = scmp.ne.s32.totalorder %s27, %s41
      %p43 = scmp.eq.s32.totalorder %s22, 0
      %p44 = por %p42, %p43
      %s46 = sadd.s32 %s45, 1
      %p49 = scmp.eq.s32.totalorder %s16, 1
      %p50 = scmp.ne.s32.totalorder %s45, %s47
      %p51 = scmp.eq.s32.totalorder %s16, 0
      %p52 = por %p50, %p51
      %p53 = scmp.ne.s32.totalorder %s45, %s47
      %p54 = scmp.eq.s32.totalorder %s21, 1
      %p55 = por %p53, %p54
      %p56 = scmp.ne.s32.totalorder %s47, %s48
      %p57 = scmp.eq.s32.totalorder %s21, 0
      %p58 = por %p56, %p57
      %p59 = scmp.ne.s32.totalorder %s47, %s48
      %p60 = scmp.eq.s32.totalorder %s22, 1
      %p61 = por %p59, %p60
      %p63 = scmp.ne.s32.totalorder %s48, %s62
      %p64 = scmp.eq.s32.totalorder %s22, 0
      %p65 = por %p63, %p64
      %s66 = ssub.s32 %s16, %s23
      %p67 = scmp.eq.s32.totalorder %s66, 0
      %s69 = sadd.s32 %s68, 1
      %s70 = scalar_select %p67, %s68, %s69
      %p73 = pneg %p67
      %p74 = scmp.eq.s32.totalorder %s16, 1
      %p75 = por %p73, %p74
      %p76 = scmp.ne.s32.totalorder %s68, %s71
      %p77 = scmp.eq.s32.totalorder %s16, 0
      %p78 = por %p76, %p77
      %p79 = scmp.ne.s32.totalorder %s68, %s71
      %p80 = scmp.eq.s32.totalorder %s21, 1
      %p81 = por %p79, %p80
      %p82 = scmp.ne.s32.totalorder %s71, %s72
      %p83 = scmp.eq.s32.totalorder %s21, 0
      %p84 = por %p82, %p83
      %p85 = scmp.ne.s32.totalorder %s71, %s72
      %p86 = scmp.eq.s32.totalorder %s22, 1
      %p87 = por %p85, %p86
      %p89 = scmp.ne.s32.totalorder %s72, %s88
      %p90 = scmp.eq.s32.totalorder %s22, 0
      %p91 = por %p89, %p90
      %s92 = ssub.s32 %s16, %s23
      %p93 = scmp.eq.s32.totalorder %s92, 0
      %s95 = sadd.s32 %s94, 1
      %s96 = scalar_select %p93, %s94, %s95
      %p99 = pneg %p93
      %p100 = scmp.eq.s32.totalorder %s16, 1
      %p101 = por %p99, %p100
      %p102 = scmp.ne.s32.totalorder %s94, %s97
      %p103 = scmp.eq.s32.totalorder %s16, 0
      %p104 = por %p102, %p103
      %p105 = scmp.ne.s32.totalorder %s94, %s97
      %p106 = scmp.eq.s32.totalorder %s21, 1
      %p107 = por %p105, %p106
      %p108 = scmp.ne.s32.totalorder %s97, %s98
      %p109 = scmp.eq.s32.totalorder %s21, 0
      %p110 = por %p108, %p109
      %p111 = scmp.ne.s32.totalorder %s97, %s98
      %p112 = scmp.eq.s32.totalorder %s22, 1
      %p113 = por %p111, %p112
      %p115 = scmp.ne.s32.totalorder %s98, %s114
      %p116 = scmp.eq.s32.totalorder %s22, 0
      %p117 = por %p115, %p116
      %s118 = ssub.s32 %s16, %s23
      %p119 = scmp.eq.s32.totalorder %s118, 0
      %s121 = sadd.s32 %s120, 1
      %s122 = scalar_select %p119, %s120, %s121
      %p125 = pneg %p119
      %p126 = scmp.eq.s32.totalorder %s16, 1
      %p127 = por %p125, %p126
      %p128 = scmp.ne.s32.totalorder %s120, %s123
      %p129 = scmp.eq.s32.totalorder %s16, 0
      %p130 = por %p128, %p129
      %p131 = scmp.ne.s32.totalorder %s120, %s123
      %p132 = scmp.eq.s32.totalorder %s21, 1
      %p133 = por %p131, %p132
      %p134 = scmp.ne.s32.totalorder %s123, %s124
      %p135 = scmp.eq.s32.totalorder %s21, 0
      %p136 = por %p134, %p135
      %p137 = scmp.ne.s32.totalorder %s123, %s124
      %p138 = scmp.eq.s32.totalorder %s22, 1
      %p139 = por %p137, %p138
      %p141 = scmp.ne.s32.totalorder %s124, %s140
      %p142 = scmp.eq.s32.totalorder %s22, 0
      %p143 = por %p141, %p142
      %p144 = scmp.le.s32.totalorder 1, %s16
      %p145 = scmp.lt.s32.totalorder %s16, 3
      %p146 = pnand %p144, %p145
      %p147 = pneg %p146
      // Predicated region
      $region9: #{tpu_custom_call.1} parent=5 // pred_check
        _
      $region10: #{tpu_custom_call.1} parent=5 // pred_check_branch
        %149 = sbr.rel (%p146) target = $region12
      $region11: #{tpu_custom_call.1} parent=5 // pred_region
        %s150 = ssub.s32 %s16, 1
        // Predicated region
        $region13: #{tpu_custom_call.1} parent=11 // pred_check
          %p151 = pneg %p37
        $region14: #{tpu_custom_call.1} parent=11 // pred_check_branch
          %153 = sbr.rel (%p151) target = $region16
        $region15: #{tpu_custom_call.1} parent=11 // pred_region
          _
        $region16: #{tpu_custom_call.1} parent=11 // pred_fallthru
          _
        // Predicated region
        $region17: #{tpu_custom_call.1} parent=11 // pred_check
          %p154 = pneg %p58
        $region18: #{tpu_custom_call.1} parent=11 // pred_check_branch
          %156 = sbr.rel (%p154) target = $region20
        $region19: #{tpu_custom_call.1} parent=11 // pred_region
          _
        $region20: #{tpu_custom_call.1} parent=11 // pred_fallthru
          _
      $region12: #{tpu_custom_call.1} parent=5 // pred_fallthru
        _
      %p157 = scmp.lt.s32.totalorder %s16, 2
      // Predicated region
      $region21: #{tpu_custom_call.1} parent=5 // pred_check
        %p158 = pneg %p157
      $region22: #{tpu_custom_call.1} parent=5 // pred_check_branch
        %160 = sbr.rel (%p158) target = $region24
      $region23: #{tpu_custom_call.1} parent=5 // pred_region
        // Predicated region
        $region25: #{tpu_custom_call.1} parent=23 // pred_check
          %p161 = pneg %p78
        $region26: #{tpu_custom_call.1} parent=23 // pred_check_branch
          %163 = sbr.rel (%p161) target = $region28
        $region27: #{tpu_custom_call.1} parent=23 // pred_region
          %s164 = smul.u32 16, %s16
          %p165 = scmp.lt.s32.totalorder %s164, 31
          %s166 = scalar_select %p165, %s164, 31
          %s167 = smul.addr %s166, 8
          %s168 = scalar_lea.vmem %s2, %s167
          %s169 = smul.u32 16, %s16
        $region28: #{tpu_custom_call.1} parent=23 // pred_fallthru
          _
        // Predicated region
        $region29: #{tpu_custom_call.1} parent=23 // pred_check
          %p170 = pneg %p104
        $region30: #{tpu_custom_call.1} parent=23 // pred_check_branch
          %172 = sbr.rel (%p170) target = $region32
        $region31: #{tpu_custom_call.1} parent=23 // pred_region
          %s173 = sand.u32 %s94, 1
          %s174 = scalar_lea.sflag [#allocation3], %s173
          %s175 = sand.u32 %s94, 1
          %s176 = smul.addr %s175, 64
          %s177 = scalar_lea.vmem [#allocation2], %s176
          %s178 = smul.u32 4, %s16
          %s180 = ssub.s32 1024, 1024
          %181 = vsyncadd %s174, %s180
          %s182 = smul.addr %s178, 2
          %s183 = smul.addr %s182, 128
          %s184 = scalar_lea.hbm %s3, %s183
          %s185 = sshll.u32 %s177, 4
          %s186 = int_to_ptr.vmem [resolvable:$true] %s185
          %191 = dma.hbm_to_vmem [thread:$0]  %s184, 1024, %s186, %s174, 256, 256, 16
        $region32: #{tpu_custom_call.1} parent=23 // pred_fallthru
          _
      $region24: #{tpu_custom_call.1} parent=5 // pred_fallthru
        _
      %p192 = scmp.le.s32.totalorder 1, %s16
      %p193 = scmp.lt.s32.totalorder %s16, 3
      %p194 = pnand %p192, %p193
      %p195 = pneg %p194
      // Predicated region
      $region33: #{tpu_custom_call.1} parent=5 // pred_check
        _
      $region34: #{tpu_custom_call.1} parent=5 // pred_check_branch
        %197 = sbr.rel (%p194) target = $region36
      $region35: #{tpu_custom_call.1} parent=5 // pred_region
        %s198 = ssub.s32 %s16, 1
        %s199 = sand.u32 %s97, 1
        %s200 = scalar_lea.sflag [#allocation3], %s199
        %s201 = sand.u32 %s97, 1
        %s202 = smul.addr %s201, 64
        %s203 = scalar_lea.vmem [#allocation2], %s202
        // Predicated region
        $region37: #{tpu_custom_call.1} parent=35 // pred_check
          %p204 = pneg %p110
        $region38: #{tpu_custom_call.1} parent=35 // pred_check_branch
          %206 = sbr.rel (%p204) target = $region40
        $region39: #{tpu_custom_call.1} parent=35 // pred_region
          %207 = dma.done %s200, 1024
        $region40: #{tpu_custom_call.1} parent=35 // pred_fallthru
          _
        %p208 = pneg %p37
        %p209 = pneg %p34
        %p210 = pneg %p58
        %p211 = pneg %p55
        %s212 = smul.u32 16, %s21
        %p213 = scmp.lt.s32.totalorder %s212, 31
        %s214 = scalar_select %p213, %s212, 31
        %s215 = smul.addr %s214, 8
        %s216 = scalar_lea.vmem %s2, %s215
        %p217 = pneg %p84
        %p218 = pneg %p81
        %s219 = sand.u32 %s97, 1
        %s220 = scalar_lea.sflag [#allocation3], %s219
        %s221 = sand.u32 %s97, 1
        %s222 = smul.addr %s221, 64
        %s223 = scalar_lea.vmem [#allocation2], %s222
        %p224 = pneg %p110
        %p225 = pneg %p107
        %p226 = pneg %p136
        %p227 = pneg %p133
        %s228 = sand.u32 %s123, 1
        %s229 = scalar_lea.sflag [#allocation4], %s228
        %s230 = sand.u32 %s123, 1
        %s231 = smul.addr %s230, 128
        %s232 = scalar_lea.vmem [#allocation5], %s231
        %s233 = smul.u32 16, %s21
        %p234 = scmp.lt.s32.totalorder %s233, 31
        %s235 = scalar_select %p234, %s233, 31
        %s236 = smul.addr %s235, 8
        %s237 = scalar_lea.vmem %s2, %s236
        %s238 = smul.u32 16, %s21
        %s239 = smul.u32 4, %s21
        %s240 = smul.u32 16, %s21
        %v243 = vld [vmem:[%s237] sm:$0xff]
        %v244 = vld [vmem:[%s237 + $0x8] sm:$0xff]
        %v245 = vld [vmem:[%s237 + $0x10] sm:$0xff]
        %v246 = vld [vmem:[%s237 + $0x18] sm:$0xff]
        %v247 = vld [vmem:[%s237 + $0x20] sm:$0xff]
        %v248 = vld [vmem:[%s237 + $0x28] sm:$0xff]
        %v249 = vld [vmem:[%s237 + $0x30] sm:$0xff]
        %v250 = vld [vmem:[%s237 + $0x38] sm:$0xff]
        %v251 = vld [vmem:[%s237 + $0x40] sm:$0xff]
        %v252 = vld [vmem:[%s237 + $0x48] sm:$0xff]
        %v253 = vld [vmem:[%s237 + $0x50] sm:$0xff]
        %v254 = vld [vmem:[%s237 + $0x58] sm:$0xff]
        %v255 = vld [vmem:[%s237 + $0x60] sm:$0xff]
        %v256 = vld [vmem:[%s237 + $0x68] sm:$0xff]
        %v257 = vld [vmem:[%s237 + $0x70] sm:$0xff]
        %v258 = vld [vmem:[%s237 + $0x78] sm:$0xff]
        %v259 = vld [vmem:[%s1] sm:$0x3]
        %261 = vset.pattern.permute.xlu0 0
        %262 = vperm.xlu0 %261, %v243
        %v263 = vpop.permute.xlu0 %262
        %266 = vset.pattern.permute.xlu0 0
        %267 = vperm.xlu0 %266, %v244
        %v268 = vpop.permute.xlu0 %267
        %271 = vset.pattern.permute.xlu0 0
        %272 = vperm.xlu0 %271, %v245
        %v273 = vpop.permute.xlu0 %272
        %276 = vset.pattern.permute.xlu0 0
        %277 = vperm.xlu0 %276, %v246
        %v278 = vpop.permute.xlu0 %277
        %281 = vset.pattern.permute.xlu0 0
        %282 = vperm.xlu0 %281, %v247
        %v283 = vpop.permute.xlu0 %282
        %286 = vset.pattern.permute.xlu0 0
        %287 = vperm.xlu0 %286, %v248
        %v288 = vpop.permute.xlu0 %287
        %291 = vset.pattern.permute.xlu0 0
        %292 = vperm.xlu0 %291, %v249
        %v293 = vpop.permute.xlu0 %292
        %296 = vset.pattern.permute.xlu0 0
        %297 = vperm.xlu0 %296, %v250
        %v298 = vpop.permute.xlu0 %297
        %301 = vset.pattern.permute.xlu0 0
        %302 = vperm.xlu0 %301, %v251
        %v303 = vpop.permute.xlu0 %302
        %306 = vset.pattern.permute.xlu0 0
        %307 = vperm.xlu0 %306, %v252
        %v308 = vpop.permute.xlu0 %307
        %311 = vset.pattern.permute.xlu0 0
        %312 = vperm.xlu0 %311, %v253
        %v313 = vpop.permute.xlu0 %312
        %316 = vset.pattern.permute.xlu0 0
        %317 = vperm.xlu0 %316, %v254
        %v318 = vpop.permute.xlu0 %317
        %321 = vset.pattern.permute.xlu0 0
        %322 = vperm.xlu0 %321, %v255
        %v323 = vpop.permute.xlu0 %322
        %326 = vset.pattern.permute.xlu0 0
        %327 = vperm.xlu0 %326, %v256
        %v328 = vpop.permute.xlu0 %327
        %331 = vset.pattern.permute.xlu0 0
        %332 = vperm.xlu0 %331, %v257
        %v333 = vpop.permute.xlu0 %332
        %336 = vset.pattern.permute.xlu0 0
        %337 = vperm.xlu0 %336, %v258
        %v338 = vpop.permute.xlu0 %337
        %v341 = vlaneseq
        %v342 = vshrl.u32 %v341, 7
        %v343 = vsub.s32 0, %v342
        %v344 = vrot.slane %v259, %v343
        %v345 = vlaneseq
        %v346 = vshrl.u32 %v345, 7
        %v347 = vsub.s32 1, %v346
        %v348 = vrot.slane %v259, %v347
        %v351 = vadd.f32 %v263, %v344
        %v352 = vadd.f32 %v263, %v348
        %v353 = vadd.f32 %v268, %v344
        %v354 = vadd.f32 %v268, %v348
        %v355 = vadd.f32 %v273, %v344
        %v356 = vadd.f32 %v273, %v348
        %v357 = vadd.f32 %v278, %v344
        %v358 = vadd.f32 %v278, %v348
        %v359 = vadd.f32 %v283, %v344
        %v360 = vadd.f32 %v283, %v348
        %v361 = vadd.f32 %v288, %v344
        %v362 = vadd.f32 %v288, %v348
        %v363 = vadd.f32 %v293, %v344
        %v364 = vadd.f32 %v293, %v348
        %v365 = vadd.f32 %v298, %v344
        %v366 = vadd.f32 %v298, %v348
        %v367 = vadd.f32 %v303, %v344
        %v368 = vadd.f32 %v303, %v348
        %v369 = vadd.f32 %v308, %v344
        %v370 = vadd.f32 %v308, %v348
        %v371 = vadd.f32 %v313, %v344
        %v372 = vadd.f32 %v313, %v348
        %v373 = vadd.f32 %v318, %v344
        %v374 = vadd.f32 %v318, %v348
        %v375 = vadd.f32 %v323, %v344
        %v376 = vadd.f32 %v323, %v348
        %v377 = vadd.f32 %v328, %v344
        %v378 = vadd.f32 %v328, %v348
        %v379 = vadd.f32 %v333, %v344
        %v380 = vadd.f32 %v333, %v348
        %v381 = vadd.f32 %v338, %v344
        %v382 = vadd.f32 %v338, %v348
        %vm383 = vcmp.gt.f32.partialorder %v351, 0.0
        %vm384 = vcmp.gt.f32.partialorder %v352, 0.0
        %vm385 = vcmp.gt.f32.partialorder %v353, 0.0
        %vm386 = vcmp.gt.f32.partialorder %v354, 0.0
        %vm387 = vcmp.gt.f32.partialorder %v355, 0.0
        %vm388 = vcmp.gt.f32.partialorder %v356, 0.0
        %vm389 = vcmp.gt.f32.partialorder %v357, 0.0
        %vm390 = vcmp.gt.f32.partialorder %v358, 0.0
        %vm391 = vcmp.gt.f32.partialorder %v359, 0.0
        %vm392 = vcmp.gt.f32.partialorder %v360, 0.0
        %vm393 = vcmp.gt.f32.partialorder %v361, 0.0
        %vm394 = vcmp.gt.f32.partialorder %v362, 0.0
        %vm395 = vcmp.gt.f32.partialorder %v363, 0.0
        %vm396 = vcmp.gt.f32.partialorder %v364, 0.0
        %vm397 = vcmp.gt.f32.partialorder %v365, 0.0
        %vm398 = vcmp.gt.f32.partialorder %v366, 0.0
        %vm399 = vcmp.gt.f32.partialorder %v367, 0.0
        %vm400 = vcmp.gt.f32.partialorder %v368, 0.0
        %vm401 = vcmp.gt.f32.partialorder %v369, 0.0
        %vm402 = vcmp.gt.f32.partialorder %v370, 0.0
        %vm403 = vcmp.gt.f32.partialorder %v371, 0.0
        %vm404 = vcmp.gt.f32.partialorder %v372, 0.0
        %vm405 = vcmp.gt.f32.partialorder %v373, 0.0
        %vm406 = vcmp.gt.f32.partialorder %v374, 0.0
        %vm407 = vcmp.gt.f32.partialorder %v375, 0.0
        %vm408 = vcmp.gt.f32.partialorder %v376, 0.0
        %vm409 = vcmp.gt.f32.partialorder %v377, 0.0
        %vm410 = vcmp.gt.f32.partialorder %v378, 0.0
        %vm411 = vcmp.gt.f32.partialorder %v379, 0.0
        %vm412 = vcmp.gt.f32.partialorder %v380, 0.0
        %vm413 = vcmp.gt.f32.partialorder %v381, 0.0
        %vm414 = vcmp.gt.f32.partialorder %v382, 0.0
        %v415 = vmul.f32 %v351, 0.01
        %v416 = vmul.f32 %v352, 0.01
        %v417 = vmul.f32 %v353, 0.01
        %v418 = vmul.f32 %v354, 0.01
        %v419 = vmul.f32 %v355, 0.01
        %v420 = vmul.f32 %v356, 0.01
        %v421 = vmul.f32 %v357, 0.01
        %v422 = vmul.f32 %v358, 0.01
        %v423 = vmul.f32 %v359, 0.01
        %v424 = vmul.f32 %v360, 0.01
        %v425 = vmul.f32 %v361, 0.01
        %v426 = vmul.f32 %v362, 0.01
        %v427 = vmul.f32 %v363, 0.01
        %v428 = vmul.f32 %v364, 0.01
        %v429 = vmul.f32 %v365, 0.01
        %v430 = vmul.f32 %v366, 0.01
        %v431 = vmul.f32 %v367, 0.01
        %v432 = vmul.f32 %v368, 0.01
        %v433 = vmul.f32 %v369, 0.01
        %v434 = vmul.f32 %v370, 0.01
        %v435 = vmul.f32 %v371, 0.01
        %v436 = vmul.f32 %v372, 0.01
        %v437 = vmul.f32 %v373, 0.01
        %v438 = vmul.f32 %v374, 0.01
        %v439 = vmul.f32 %v375, 0.01
        %v440 = vmul.f32 %v376, 0.01
        %v441 = vmul.f32 %v377, 0.01
        %v442 = vmul.f32 %v378, 0.01
        %v443 = vmul.f32 %v379, 0.01
        %v444 = vmul.f32 %v380, 0.01
        %v445 = vmul.f32 %v381, 0.01
        %v446 = vmul.f32 %v382, 0.01
        %v447 = vsel %vm383, %v351, %v415
        %v448 = vsel %vm384, %v352, %v416
        %v449 = vsel %vm385, %v353, %v417
        %v450 = vsel %vm386, %v354, %v418
        %v451 = vsel %vm387, %v355, %v419
        %v452 = vsel %vm388, %v356, %v420
        %v453 = vsel %vm389, %v357, %v421
        %v454 = vsel %vm390, %v358, %v422
        %v455 = vsel %vm391, %v359, %v423
        %v456 = vsel %vm392, %v360, %v424
        %v457 = vsel %vm393, %v361, %v425
        %v458 = vsel %vm394, %v362, %v426
        %v459 = vsel %vm395, %v363, %v427
        %v460 = vsel %vm396, %v364, %v428
        %v461 = vsel %vm397, %v365, %v429
        %v462 = vsel %vm398, %v366, %v430
        %v463 = vsel %vm399, %v367, %v431
        %v464 = vsel %vm400, %v368, %v432
        %v465 = vsel %vm401, %v369, %v433
        %v466 = vsel %vm402, %v370, %v434
        %v467 = vsel %vm403, %v371, %v435
        %v468 = vsel %vm404, %v372, %v436
        %v469 = vsel %vm405, %v373, %v437
        %v470 = vsel %vm406, %v374, %v438
        %v471 = vsel %vm407, %v375, %v439
        %v472 = vsel %vm408, %v376, %v440
        %v473 = vsel %vm409, %v377, %v441
        %v474 = vsel %vm410, %v378, %v442
        %v475 = vsel %vm411, %v379, %v443
        %v476 = vsel %vm412, %v380, %v444
        %v477 = vsel %vm413, %v381, %v445
        %v478 = vsel %vm414, %v382, %v446
        %v479 = vld [vmem:[%s203] sm:$0xff]
        %v480 = vld [vmem:[%s203 + $0x8] sm:$0xff]
        %v481 = vld [vmem:[%s203 + $0x10] sm:$0xff]
        %v482 = vld [vmem:[%s203 + $0x18] sm:$0xff]
        %v483 = vld [vmem:[%s203 + $0x20] sm:$0xff]
        %v484 = vld [vmem:[%s203 + $0x28] sm:$0xff]
        %v485 = vld [vmem:[%s203 + $0x30] sm:$0xff]
        %v486 = vld [vmem:[%s203 + $0x38] sm:$0xff]
        %vm487 = vnez %v479
        %vm488 = vnez %v480
        %vm489 = vnez %v481
        %vm490 = vnez %v482
        %vm491 = vnez %v483
        %vm492 = vnez %v484
        %vm493 = vnez %v485
        %vm494 = vnez %v486
        %v495 = vsel %vm487, 16843009, 0
        %v496 = vsel %vm488, 16843009, 0
        %v497 = vsel %vm489, 16843009, 0
        %v498 = vsel %vm490, 16843009, 0
        %v499 = vsel %vm491, 16843009, 0
        %v500 = vsel %vm492, 16843009, 0
        %v501 = vsel %vm493, 16843009, 0
        %v502 = vsel %vm494, 16843009, 0
        %v503 = vunpack.c.0.s8 %v495
        %v504 = vunpack.c.0.s8 %v496
        %v505 = vunpack.c.1.s8 %v495
        %v506 = vunpack.c.1.s8 %v496
        %v507 = vunpack.c.2.s8 %v495
        %v508 = vunpack.c.2.s8 %v496
        %v509 = vunpack.c.3.s8 %v495
        %v510 = vunpack.c.3.s8 %v496
        %v511 = vunpack.c.0.s8 %v497
        %v512 = vunpack.c.0.s8 %v498
        %v513 = vunpack.c.1.s8 %v497
        %v514 = vunpack.c.1.s8 %v498
        %v515 = vunpack.c.2.s8 %v497
        %v516 = vunpack.c.2.s8 %v498
        %v517 = vunpack.c.3.s8 %v497
        %v518 = vunpack.c.3.s8 %v498
        %v519 = vunpack.c.0.s8 %v499
        %v520 = vunpack.c.0.s8 %v500
        %v521 = vunpack.c.1.s8 %v499
        %v522 = vunpack.c.1.s8 %v500
        %v523 = vunpack.c.2.s8 %v499
        %v524 = vunpack.c.2.s8 %v500
        %v525 = vunpack.c.3.s8 %v499
        %v526 = vunpack.c.3.s8 %v500
        %v527 = vunpack.c.0.s8 %v501
        %v528 = vunpack.c.0.s8 %v502
        %v529 = vunpack.c.1.s8 %v501
        %v530 = vunpack.c.1.s8 %v502
        %v531 = vunpack.c.2.s8 %v501
        %v532 = vunpack.c.2.s8 %v502
        %v533 = vunpack.c.3.s8 %v501
        %v534 = vunpack.c.3.s8 %v502
        %v535 = vpack.c.b16 %v504, %v503
        %v536 = vpack.c.b8 %v535, %v535
        %v537 = vpack.c.b16 %v506, %v505
        %v538 = vpack.c.b8 %v537, %v537
        %v539 = vpack.c.b16 %v508, %v507
        %v540 = vpack.c.b8 %v539, %v539
        %v541 = vpack.c.b16 %v510, %v509
        %v542 = vpack.c.b8 %v541, %v541
        %v543 = vpack.c.b16 %v512, %v511
        %v544 = vpack.c.b8 %v543, %v543
        %v545 = vpack.c.b16 %v514, %v513
        %v546 = vpack.c.b8 %v545, %v545
        %v547 = vpack.c.b16 %v516, %v515
        %v548 = vpack.c.b8 %v547, %v547
        %v549 = vpack.c.b16 %v518, %v517
        %v550 = vpack.c.b8 %v549, %v549
        %v551 = vpack.c.b16 %v520, %v519
        %v552 = vpack.c.b8 %v551, %v551
        %v553 = vpack.c.b16 %v522, %v521
        %v554 = vpack.c.b8 %v553, %v553
        %v555 = vpack.c.b16 %v524, %v523
        %v556 = vpack.c.b8 %v555, %v555
        %v557 = vpack.c.b16 %v526, %v525
        %v558 = vpack.c.b8 %v557, %v557
        %v559 = vpack.c.b16 %v528, %v527
        %v560 = vpack.c.b8 %v559, %v559
        %v561 = vpack.c.b16 %v530, %v529
        %v562 = vpack.c.b8 %v561, %v561
        %v563 = vpack.c.b16 %v532, %v531
        %v564 = vpack.c.b8 %v563, %v563
        %v565 = vpack.c.b16 %v534, %v533
        %v566 = vpack.c.b8 %v565, %v565
        %vm567 = vnez %v536
        %vm568 = vnez %v538
        %vm569 = vnez %v540
        %vm570 = vnez %v542
        %vm571 = vnez %v544
        %vm572 = vnez %v546
        %vm573 = vnez %v548
        %vm574 = vnez %v550
        %vm575 = vnez %v552
        %vm576 = vnez %v554
        %vm577 = vnez %v556
        %vm578 = vnez %v558
        %vm579 = vnez %v560
        %vm580 = vnez %v562
        %vm581 = vnez %v564
        %vm582 = vnez %v566
        %v583 = vsel %vm567, 16843009, 0
        %v584 = vsel %vm568, 16843009, 0
        %v585 = vsel %vm569, 16843009, 0
        %v586 = vsel %vm570, 16843009, 0
        %v587 = vsel %vm571, 16843009, 0
        %v588 = vsel %vm572, 16843009, 0
        %v589 = vsel %vm573, 16843009, 0
        %v590 = vsel %vm574, 16843009, 0
        %v591 = vsel %vm575, 16843009, 0
        %v592 = vsel %vm576, 16843009, 0
        %v593 = vsel %vm577, 16843009, 0
        %v594 = vsel %vm578, 16843009, 0
        %v595 = vsel %vm579, 16843009, 0
        %v596 = vsel %vm580, 16843009, 0
        %v597 = vsel %vm581, 16843009, 0
        %v598 = vsel %vm582, 16843009, 0
        %v599 = vunpack.c.0.s8 %v583
        %v600 = vunpack.c.1.s8 %v583
        %v601 = vunpack.c.0.s8 %v584
        %v602 = vunpack.c.1.s8 %v584
        %v603 = vunpack.c.0.s8 %v585
        %v604 = vunpack.c.1.s8 %v585
        %v605 = vunpack.c.0.s8 %v586
        %v606 = vunpack.c.1.s8 %v586
        %v607 = vunpack.c.0.s8 %v587
        %v608 = vunpack.c.1.s8 %v587
        %v609 = vunpack.c.0.s8 %v588
        %v610 = vunpack.c.1.s8 %v588
        %v611 = vunpack.c.0.s8 %v589
        %v612 = vunpack.c.1.s8 %v589
        %v613 = vunpack.c.0.s8 %v590
        %v614 = vunpack.c.1.s8 %v590
        %v615 = vunpack.c.0.s8 %v591
        %v616 = vunpack.c.1.s8 %v591
        %v617 = vunpack.c.0.s8 %v592
        %v618 = vunpack.c.1.s8 %v592
        %v619 = vunpack.c.0.s8 %v593
        %v620 = vunpack.c.1.s8 %v593
        %v621 = vunpack.c.0.s8 %v594
        %v622 = vunpack.c.1.s8 %v594
        %v623 = vunpack.c.0.s8 %v595
        %v624 = vunpack.c.1.s8 %v595
        %v625 = vunpack.c.0.s8 %v596
        %v626 = vunpack.c.1.s8 %v596
        %v627 = vunpack.c.0.s8 %v597
        %v628 = vunpack.c.1.s8 %v597
        %v629 = vunpack.c.0.s8 %v598
        %v630 = vunpack.c.1.s8 %v598
        %vm631 = vcmp.ne.s32.totalorder %v599, 0
        %vm632 = vcmp.ne.s32.totalorder %v600, 0
        %vm633 = vcmp.ne.s32.totalorder %v601, 0
        %vm634 = vcmp.ne.s32.totalorder %v602, 0
        %vm635 = vcmp.ne.s32.totalorder %v603, 0
        %vm636 = vcmp.ne.s32.totalorder %v604, 0
        %vm637 = vcmp.ne.s32.totalorder %v605, 0
        %vm638 = vcmp.ne.s32.totalorder %v606, 0
        %vm639 = vcmp.ne.s32.totalorder %v607, 0
        %vm640 = vcmp.ne.s32.totalorder %v608, 0
        %vm641 = vcmp.ne.s32.totalorder %v609, 0
        %vm642 = vcmp.ne.s32.totalorder %v610, 0
        %vm643 = vcmp.ne.s32.totalorder %v611, 0
        %vm644 = vcmp.ne.s32.totalorder %v612, 0
        %vm645 = vcmp.ne.s32.totalorder %v613, 0
        %vm646 = vcmp.ne.s32.totalorder %v614, 0
        %vm647 = vcmp.ne.s32.totalorder %v615, 0
        %vm648 = vcmp.ne.s32.totalorder %v616, 0
        %vm649 = vcmp.ne.s32.totalorder %v617, 0
        %vm650 = vcmp.ne.s32.totalorder %v618, 0
        %vm651 = vcmp.ne.s32.totalorder %v619, 0
        %vm652 = vcmp.ne.s32.totalorder %v620, 0
        %vm653 = vcmp.ne.s32.totalorder %v621, 0
        %vm654 = vcmp.ne.s32.totalorder %v622, 0
        %vm655 = vcmp.ne.s32.totalorder %v623, 0
        %vm656 = vcmp.ne.s32.totalorder %v624, 0
        %vm657 = vcmp.ne.s32.totalorder %v625, 0
        %vm658 = vcmp.ne.s32.totalorder %v626, 0
        %vm659 = vcmp.ne.s32.totalorder %v627, 0
        %vm660 = vcmp.ne.s32.totalorder %v628, 0
        %vm661 = vcmp.ne.s32.totalorder %v629, 0
        %vm662 = vcmp.ne.s32.totalorder %v630, 0
        %v663 = vsel %vm631, %v447, -1e+30
        %v664 = vsel %vm632, %v448, -1e+30
        %v665 = vsel %vm633, %v449, -1e+30
        %v666 = vsel %vm634, %v450, -1e+30
        %v667 = vsel %vm635, %v451, -1e+30
        %v668 = vsel %vm636, %v452, -1e+30
        %v669 = vsel %vm637, %v453, -1e+30
        %v670 = vsel %vm638, %v454, -1e+30
        %v671 = vsel %vm639, %v455, -1e+30
        %v672 = vsel %vm640, %v456, -1e+30
        %v673 = vsel %vm641, %v457, -1e+30
        %v674 = vsel %vm642, %v458, -1e+30
        %v675 = vsel %vm643, %v459, -1e+30
        %v676 = vsel %vm644, %v460, -1e+30
        %v677 = vsel %vm645, %v461, -1e+30
        %v678 = vsel %vm646, %v462, -1e+30
        %v679 = vsel %vm647, %v463, -1e+30
        %v680 = vsel %vm648, %v464, -1e+30
        %v681 = vsel %vm649, %v465, -1e+30
        %v682 = vsel %vm650, %v466, -1e+30
        %v683 = vsel %vm651, %v467, -1e+30
        %v684 = vsel %vm652, %v468, -1e+30
        %v685 = vsel %vm653, %v469, -1e+30
        %v686 = vsel %vm654, %v470, -1e+30
        %v687 = vsel %vm655, %v471, -1e+30
        %v688 = vsel %vm656, %v472, -1e+30
        %v689 = vsel %vm657, %v473, -1e+30
        %v690 = vsel %vm658, %v474, -1e+30
        %v691 = vsel %vm659, %v475, -1e+30
        %v692 = vsel %vm660, %v476, -1e+30
        %v693 = vsel %vm661, %v477, -1e+30
        %v694 = vsel %vm662, %v478, -1e+30
        %v695 = vmax.f32 %v663, %v664
        %696 = vmax.xlane.f32.xlu0 %v695
        %v697 = vpop.xlane.xlu0 %696
        %v698 = vmax.f32 %v665, %v666
        %699 = vmax.xlane.f32.xlu0 %v698
        %v700 = vpop.xlane.xlu0 %699
        %v701 = vmax.f32 %v667, %v668
        %702 = vmax.xlane.f32.xlu0 %v701
        %v703 = vpop.xlane.xlu0 %702
        %v704 = vmax.f32 %v669, %v670
        %705 = vmax.xlane.f32.xlu0 %v704
        %v706 = vpop.xlane.xlu0 %705
        %v707 = vmax.f32 %v671, %v672
        %708 = vmax.xlane.f32.xlu0 %v707
        %v709 = vpop.xlane.xlu0 %708
        %v710 = vmax.f32 %v673, %v674
        %711 = vmax.xlane.f32.xlu0 %v710
        %v712 = vpop.xlane.xlu0 %711
        %v713 = vmax.f32 %v675, %v676
        %714 = vmax.xlane.f32.xlu0 %v713
        %v715 = vpop.xlane.xlu0 %714
        %v716 = vmax.f32 %v677, %v678
        %717 = vmax.xlane.f32.xlu0 %v716
        %v718 = vpop.xlane.xlu0 %717
        %v719 = vmax.f32 %v679, %v680
        %720 = vmax.xlane.f32.xlu0 %v719
        %v721 = vpop.xlane.xlu0 %720
        %v722 = vmax.f32 %v681, %v682
        %723 = vmax.xlane.f32.xlu0 %v722
        %v724 = vpop.xlane.xlu0 %723
        %v725 = vmax.f32 %v683, %v684
        %726 = vmax.xlane.f32.xlu0 %v725
        %v727 = vpop.xlane.xlu0 %726
        %v728 = vmax.f32 %v685, %v686
        %729 = vmax.xlane.f32.xlu0 %v728
        %v730 = vpop.xlane.xlu0 %729
        %v731 = vmax.f32 %v687, %v688
        %732 = vmax.xlane.f32.xlu0 %v731
        %v733 = vpop.xlane.xlu0 %732
        %v734 = vmax.f32 %v689, %v690
        %735 = vmax.xlane.f32.xlu0 %v734
        %v736 = vpop.xlane.xlu0 %735
        %v737 = vmax.f32 %v691, %v692
        %738 = vmax.xlane.f32.xlu0 %v737
        %v739 = vpop.xlane.xlu0 %738
        %v740 = vmax.f32 %v693, %v694
        %741 = vmax.xlane.f32.xlu0 %v740
        %v742 = vpop.xlane.xlu0 %741
        %v743 = vsub.f32 %v663, %v697
        %v744 = vsub.f32 %v664, %v697
        %v745 = vsub.f32 %v665, %v700
        %v746 = vsub.f32 %v666, %v700
        %v747 = vsub.f32 %v667, %v703
        %v748 = vsub.f32 %v668, %v703
        %v749 = vsub.f32 %v669, %v706
        %v750 = vsub.f32 %v670, %v706
        %v751 = vsub.f32 %v671, %v709
        %v752 = vsub.f32 %v672, %v709
        %v753 = vsub.f32 %v673, %v712
        %v754 = vsub.f32 %v674, %v712
        %v755 = vsub.f32 %v675, %v715
        %v756 = vsub.f32 %v676, %v715
        %v757 = vsub.f32 %v677, %v718
        %v758 = vsub.f32 %v678, %v718
        %v759 = vsub.f32 %v679, %v721
        %v760 = vsub.f32 %v680, %v721
        %v761 = vsub.f32 %v681, %v724
        %v762 = vsub.f32 %v682, %v724
        %v763 = vsub.f32 %v683, %v727
        %v764 = vsub.f32 %v684, %v727
        %v765 = vsub.f32 %v685, %v730
        %v766 = vsub.f32 %v686, %v730
        %v767 = vsub.f32 %v687, %v733
        %v768 = vsub.f32 %v688, %v733
        %v769 = vsub.f32 %v689, %v736
        %v770 = vsub.f32 %v690, %v736
        %v771 = vsub.f32 %v691, %v739
        %v772 = vsub.f32 %v692, %v739
        %v773 = vsub.f32 %v693, %v742
        %v774 = vsub.f32 %v694, %v742
        %v775 = vmul.f32 %v743, 1.442695
        %v776 = vpow.pop %v775
        %v777 = vmul.f32 %v744, 1.442695
        %v778 = vpow.pop %v777
        %v779 = vmul.f32 %v745, 1.442695
        %v780 = vpow.pop %v779
        %v781 = vmul.f32 %v746, 1.442695
        %v782 = vpow.pop %v781
        %v783 = vmul.f32 %v747, 1.442695
        %v784 = vpow.pop %v783
        %v785 = vmul.f32 %v748, 1.442695
        %v786 = vpow.pop %v785
        %v787 = vmul.f32 %v749, 1.442695
        %v788 = vpow.pop %v787
        %v789 = vmul.f32 %v750, 1.442695
        %v790 = vpow.pop %v789
        %v791 = vmul.f32 %v751, 1.442695
        %v792 = vpow.pop %v791
        %v793 = vmul.f32 %v752, 1.442695
        %v794 = vpow.pop %v793
        %v795 = vmul.f32 %v753, 1.442695
        %v796 = vpow.pop %v795
        %v797 = vmul.f32 %v754, 1.442695
        %v798 = vpow.pop %v797
        %v799 = vmul.f32 %v755, 1.442695
        %v800 = vpow.pop %v799
        %v801 = vmul.f32 %v756, 1.442695
        %v802 = vpow.pop %v801
        %v803 = vmul.f32 %v757, 1.442695
        %v804 = vpow.pop %v803
        %v805 = vmul.f32 %v758, 1.442695
        %v806 = vpow.pop %v805
        %v807 = vmul.f32 %v759, 1.442695
        %v808 = vpow.pop %v807
        %v809 = vmul.f32 %v760, 1.442695
        %v810 = vpow.pop %v809
        %v811 = vmul.f32 %v761, 1.442695
        %v812 = vpow.pop %v811
        %v813 = vmul.f32 %v762, 1.442695
        %v814 = vpow.pop %v813
        %v815 = vmul.f32 %v763, 1.442695
        %v816 = vpow.pop %v815
        %v817 = vmul.f32 %v764, 1.442695
        %v818 = vpow.pop %v817
        %v819 = vmul.f32 %v765, 1.442695
        %v820 = vpow.pop %v819
        %v821 = vmul.f32 %v766, 1.442695
        %v822 = vpow.pop %v821
        %v823 = vmul.f32 %v767, 1.442695
        %v824 = vpow.pop %v823
        %v825 = vmul.f32 %v768, 1.442695
        %v826 = vpow.pop %v825
        %v827 = vmul.f32 %v769, 1.442695
        %v828 = vpow.pop %v827
        %v829 = vmul.f32 %v770, 1.442695
        %v830 = vpow.pop %v829
        %v831 = vmul.f32 %v771, 1.442695
        %v832 = vpow.pop %v831
        %v833 = vmul.f32 %v772, 1.442695
        %v834 = vpow.pop %v833
        %v835 = vmul.f32 %v773, 1.442695
        %v836 = vpow.pop %v835
        %v837 = vmul.f32 %v774, 1.442695
        %v838 = vpow.pop %v837
        %v839 = vld [vmem:[%s0] sm:$0xff]
        %v840 = vld [vmem:[%s0 + $0x8] sm:$0xff]
        %v841 = vld [vmem:[%s0 + $0x10] sm:$0xff]
        %v842 = vld [vmem:[%s0 + $0x18] sm:$0xff]
        %v843 = vld [vmem:[%s0 + $0x20] sm:$0xff]
        %v844 = vld [vmem:[%s0 + $0x28] sm:$0xff]
        %v845 = vld [vmem:[%s0 + $0x30] sm:$0xff]
        %v846 = vld [vmem:[%s0 + $0x38] sm:$0xff]
        %v847 = vld [vmem:[%s0 + $0x40] sm:$0xff]
        %v848 = vld [vmem:[%s0 + $0x48] sm:$0xff]
        %v849 = vld [vmem:[%s0 + $0x50] sm:$0xff]
        %v850 = vld [vmem:[%s0 + $0x58] sm:$0xff]
        %v851 = vld [vmem:[%s0 + $0x60] sm:$0xff]
        %v852 = vld [vmem:[%s0 + $0x68] sm:$0xff]
        %v853 = vld [vmem:[%s0 + $0x70] sm:$0xff]
        %v854 = vld [vmem:[%s0 + $0x78] sm:$0xff]
        %v855 = vld [vmem:[%s0 + $0x80] sm:$0xff]
        %v856 = vld [vmem:[%s0 + $0x88] sm:$0xff]
        %v857 = vld [vmem:[%s0 + $0x90] sm:$0xff]
        %v858 = vld [vmem:[%s0 + $0x98] sm:$0xff]
        %v859 = vld [vmem:[%s0 + $0xa0] sm:$0xff]
        %v860 = vld [vmem:[%s0 + $0xa8] sm:$0xff]
        %v861 = vld [vmem:[%s0 + $0xb0] sm:$0xff]
        %v862 = vld [vmem:[%s0 + $0xb8] sm:$0xff]
        %v863 = vld [vmem:[%s0 + $0xc0] sm:$0xff]
        %v864 = vld [vmem:[%s0 + $0xc8] sm:$0xff]
        %v865 = vld [vmem:[%s0 + $0xd0] sm:$0xff]
        %v866 = vld [vmem:[%s0 + $0xd8] sm:$0xff]
        %v867 = vld [vmem:[%s0 + $0xe0] sm:$0xff]
        %v868 = vld [vmem:[%s0 + $0xe8] sm:$0xff]
        %v869 = vld [vmem:[%s0 + $0xf0] sm:$0xff]
        %v870 = vld [vmem:[%s0 + $0xf8] sm:$0xff]
        %871 = vmatprep.subr.mxu0 0.0
        %872 = vmatpush1.msra.mxu0 %v839
        %873 = vmatprep.subr.mxu0 0.0
        %874 = vmatpush1.msra.mxu0 %v840
        %875 = vmatprep.subr.mxu0 0.0
        %876 = vmatpush1.msra.mxu0 %v841
        %877 = vmatprep.subr.mxu0 0.0
        %878 = vmatpush1.msra.mxu0 %v842
        %879 = vmatprep.subr.mxu0 0.0
        %880 = vmatpush1.msra.mxu0 %v843
        %881 = vmatprep.subr.mxu0 0.0
        %882 = vmatpush1.msra.mxu0 %v844
        %883 = vmatprep.subr.mxu0 0.0
        %884 = vmatpush1.msra.mxu0 %v845
        %885 = vmatprep.subr.mxu0 0.0
        %886 = vmatpush1.msra.mxu0 %v846
        %887 = vmatprep.subr.mxu0 0.0
        %888 = vmatpush1.msra.mxu0 %v847
        %889 = vmatprep.subr.mxu0 0.0
        %890 = vmatpush1.msra.mxu0 %v848
        %891 = vmatprep.subr.mxu0 0.0
        %892 = vmatpush1.msra.mxu0 %v849
        %893 = vmatprep.subr.mxu0 0.0
        %894 = vmatpush1.msra.mxu0 %v850
        %895 = vmatprep.subr.mxu0 0.0
        %896 = vmatpush1.msra.mxu0 %v851
        %897 = vmatprep.subr.mxu0 0.0
        %898 = vmatpush1.msra.mxu0 %v852
        %899 = vmatprep.subr.mxu0 0.0
        %900 = vmatpush1.msra.mxu0 %v853
        %901 = vmatprep.subr.mxu0 0.0
        %902 = vmatpush1.msra.mxu0 %v854
        %903 = vmatprep.subr.mxu0 0.0
        %904 = vmatpush1.msra.mxu0 %v855
        %905 = vmatprep.subr.mxu0 0.0
        %906 = vmatpush1.msra.mxu0 %v856
        %907 = vmatprep.subr.mxu0 0.0
        %908 = vmatpush1.msra.mxu0 %v857
        %909 = vmatprep.subr.mxu0 0.0
        %910 = vmatpush1.msra.mxu0 %v858
        %911 = vmatprep.subr.mxu0 0.0
        %912 = vmatpush1.msra.mxu0 %v859
        %913 = vmatprep.subr.mxu0 0.0
        %914 = vmatpush1.msra.mxu0 %v860
        %915 = vmatprep.subr.mxu0 0.0
        %916 = vmatpush1.msra.mxu0 %v861
        %917 = vmatprep.subr.mxu0 0.0
        %918 = vmatpush1.msra.mxu0 %v862
        %919 = vmatprep.subr.mxu0 0.0
        %920 = vmatpush1.msra.mxu0 %v863
        %921 = vmatprep.subr.mxu0 0.0
        %922 = vmatpush1.msra.mxu0 %v864
        %923 = vmatprep.subr.mxu0 0.0
        %924 = vmatpush1.msra.mxu0 %v865
        %925 = vmatprep.subr.mxu0 0.0
        %926 = vmatpush1.msra.mxu0 %v866
        %927 = vmatprep.subr.mxu0 0.0
        %928 = vmatpush1.msra.mxu0 %v867
        %929 = vmatprep.subr.mxu0 0.0
        %930 = vmatpush1.msra.mxu0 %v868
        %931 = vmatprep.subr.mxu0 0.0
        %932 = vmatpush1.msra.mxu0 %v869
        %933 = vmatprep.subr.mxu0 0.0
        %934 = vmatpush1.msra.mxu0 %v870
        %935 = vmatprep.mubr.f32.mxu0 %v778
        %936 = vmatmul.mubr.f32.gmra.mrb[0].mxu0 %v776
        %v937 = vpop.f32.mrb[0].mxu0
        %v938 = vadd.f32 0.0, %v937
        %v939 = vpop.f32.mrb[0].mxu0
        %940 = vmatprep.mubr.f32.mxu0 %v782
        %941 = vmatmul.mubr.f32.gmra.mrb[0].mxu0 %v780
        %v942 = vpop.f32.mrb[0].mxu0
        %v943 = vadd.f32 0.0, %v942
        %v944 = vpop.f32.mrb[0].mxu0
        %945 = vmatprep.mubr.f32.mxu0 %v786
        %946 = vmatmul.mubr.f32.gmra.mrb[0].mxu0 %v784
        %v947 = vpop.f32.mrb[0].mxu0
        %v948 = vadd.f32 0.0, %v947
        %v949 = vpop.f32.mrb[0].mxu0
        %950 = vmatprep.mubr.f32.mxu0 %v790
        %951 = vmatmul.mubr.f32.gmra.mrb[0].mxu0 %v788
        %v952 = vpop.f32.mrb[0].mxu0
        %v953 = vadd.f32 0.0, %v952
        %v954 = vpop.f32.mrb[0].mxu0
        %955 = vmatprep.mubr.f32.mxu0 %v794
        %956 = vmatmul.mubr.f32.gmra.mrb[0].mxu0 %v792
        %v957 = vpop.f32.mrb[0].mxu0
        %v958 = vadd.f32 0.0, %v957
        %v959 = vpop.f32.mrb[0].mxu0
        %960 = vmatprep.mubr.f32.mxu0 %v798
        %961 = vmatmul.mubr.f32.gmra.mrb[0].mxu0 %v796
        %v962 = vpop.f32.mrb[0].mxu0
        %v963 = vadd.f32 0.0, %v962
        %v964 = vpop.f32.mrb[0].mxu0
        %965 = vmatprep.mubr.f32.mxu0 %v802
        %966 = vmatmul.mubr.f32.gmra.mrb[0].mxu0 %v800
        %v967 = vpop.f32.mrb[0].mxu0
        %v968 = vadd.f32 0.0, %v967
        %v969 = vpop.f32.mrb[0].mxu0
        %970 = vmatprep.mubr.f32.mxu0 %v806
        %971 = vmatmul.mubr.f32.gmra.mrb[0].mxu0 %v804
        %v972 = vpop.f32.mrb[0].mxu0
        %v973 = vadd.f32 0.0, %v972
        %v974 = vpop.f32.mrb[0].mxu0
        %975 = vmatprep.mubr.f32.mxu0 %v810
        %976 = vmatmul.mubr.f32.gmra.mrb[0].mxu0 %v808
        %v977 = vpop.f32.mrb[0].mxu0
        %v978 = vadd.f32 0.0, %v977
        %v979 = vpop.f32.mrb[0].mxu0
        %980 = vmatprep.mubr.f32.mxu0 %v814
        %981 = vmatmul.mubr.f32.gmra.mrb[0].mxu0 %v812
        %v982 = vpop.f32.mrb[0].mxu0
        %v983 = vadd.f32 0.0, %v982
        %v984 = vpop.f32.mrb[0].mxu0
        %985 = vmatprep.mubr.f32.mxu0 %v818
        %986 = vmatmul.mubr.f32.gmra.mrb[0].mxu0 %v816
        %v987 = vpop.f32.mrb[0].mxu0
        %v988 = vadd.f32 0.0, %v987
        %v989 = vpop.f32.mrb[0].mxu0
        %990 = vmatprep.mubr.f32.mxu0 %v822
        %991 = vmatmul.mubr.f32.gmra.mrb[0].mxu0 %v820
        %v992 = vpop.f32.mrb[0].mxu0
        %v993 = vadd.f32 0.0, %v992
        %v994 = vpop.f32.mrb[0].mxu0
        %995 = vmatprep.mubr.f32.mxu0 %v826
        %996 = vmatmul.mubr.f32.gmra.mrb[0].mxu0 %v824
        %v997 = vpop.f32.mrb[0].mxu0
        %v998 = vadd.f32 0.0, %v997
        %v999 = vpop.f32.mrb[0].mxu0
        %1000 = vmatprep.mubr.f32.mxu0 %v830
        %1001 = vmatmul.mubr.f32.gmra.mrb[0].mxu0 %v828
        %v1002 = vpop.f32.mrb[0].mxu0
        %v1003 = vadd.f32 0.0, %v1002
        %v1004 = vpop.f32.mrb[0].mxu0
        %1005 = vmatprep.mubr.f32.mxu0 %v834
        %1006 = vmatmul.mubr.f32.gmra.mrb[0].mxu0 %v832
        %v1007 = vpop.f32.mrb[0].mxu0
        %v1008 = vadd.f32 0.0, %v1007
        %v1009 = vpop.f32.mrb[0].mxu0
        %1010 = vmatprep.mubr.f32.mxu0 %v838
        %1011 = vmatmul.mubr.f32.gmra.mrb[0].mxu0 %v836
        %v1012 = vpop.f32.mrb[0].mxu0
        %v1013 = vadd.f32 0.0, %v1012
        %v1014 = vpop.f32.mrb[0].mxu0
        %1015 = vdwg.mxu0
        %v1016 = vmax.f32 %v938, 1e-30
        %v1017 = vmax.f32 %v943, 1e-30
        %v1018 = vmax.f32 %v948, 1e-30
        %v1019 = vmax.f32 %v953, 1e-30
        %v1020 = vmax.f32 %v958, 1e-30
        %v1021 = vmax.f32 %v963, 1e-30
        %v1022 = vmax.f32 %v968, 1e-30
        %v1023 = vmax.f32 %v973, 1e-30
        %v1024 = vmax.f32 %v978, 1e-30
        %v1025 = vmax.f32 %v983, 1e-30
        %v1026 = vmax.f32 %v988, 1e-30
        %v1027 = vmax.f32 %v993, 1e-30
        %v1028 = vmax.f32 %v998, 1e-30
        %v1029 = vmax.f32 %v1003, 1e-30
        %v1030 = vmax.f32 %v1008, 1e-30
        %v1031 = vmax.f32 %v1013, 1e-30
        %v1032 = vrcp.pop %v1016
        %v1033 = vrcp.pop %v1017
        %v1034 = vrcp.pop %v1018
        %v1035 = vrcp.pop %v1019
        %v1036 = vrcp.pop %v1020
        %v1037 = vrcp.pop %v1021
        %v1038 = vrcp.pop %v1022
        %v1039 = vrcp.pop %v1023
        %v1040 = vrcp.pop %v1024
        %v1041 = vrcp.pop %v1025
        %v1042 = vrcp.pop %v1026
        %v1043 = vrcp.pop %v1027
        %v1044 = vrcp.pop %v1028
        %v1045 = vrcp.pop %v1029
        %v1046 = vrcp.pop %v1030
        %v1047 = vrcp.pop %v1031
        %1049 = vset.pattern.permute.xlu0 10
        %1050 = vperm.xlu0 %1049, %v1032
        %v1051 = vpop.permute.xlu0 %1050
        %1054 = vset.pattern.permute.xlu0 10
        %1055 = vperm.xlu0 %1054, %v1033
        %v1056 = vpop.permute.xlu0 %1055
        %1059 = vset.pattern.permute.xlu0 10
        %1060 = vperm.xlu0 %1059, %v1034
        %v1061 = vpop.permute.xlu0 %1060
        %1064 = vset.pattern.permute.xlu0 10
        %1065 = vperm.xlu0 %1064, %v1035
        %v1066 = vpop.permute.xlu0 %1065
        %1069 = vset.pattern.permute.xlu0 10
        %1070 = vperm.xlu0 %1069, %v1036
        %v1071 = vpop.permute.xlu0 %1070
        %1074 = vset.pattern.permute.xlu0 10
        %1075 = vperm.xlu0 %1074, %v1037
        %v1076 = vpop.permute.xlu0 %1075
        %1079 = vset.pattern.permute.xlu0 10
        %1080 = vperm.xlu0 %1079, %v1038
        %v1081 = vpop.permute.xlu0 %1080
        %1084 = vset.pattern.permute.xlu0 10
        %1085 = vperm.xlu0 %1084, %v1039
        %v1086 = vpop.permute.xlu0 %1085
        %1089 = vset.pattern.permute.xlu0 10
        %1090 = vperm.xlu0 %1089, %v1040
        %v1091 = vpop.permute.xlu0 %1090
        %1094 = vset.pattern.permute.xlu0 10
        %1095 = vperm.xlu0 %1094, %v1041
        %v1096 = vpop.permute.xlu0 %1095
        %1099 = vset.pattern.permute.xlu0 10
        %1100 = vperm.xlu0 %1099, %v1042
        %v1101 = vpop.permute.xlu0 %1100
        %1104 = vset.pattern.permute.xlu0 10
        %1105 = vperm.xlu0 %1104, %v1043
        %v1106 = vpop.permute.xlu0 %1105
        %1109 = vset.pattern.permute.xlu0 10
        %1110 = vperm.xlu0 %1109, %v1044
        %v1111 = vpop.permute.xlu0 %1110
        %1114 = vset.pattern.permute.xlu0 10
        %1115 = vperm.xlu0 %1114, %v1045
        %v1116 = vpop.permute.xlu0 %1115
        %1119 = vset.pattern.permute.xlu0 10
        %1120 = vperm.xlu0 %1119, %v1046
        %v1121 = vpop.permute.xlu0 %1120
        %1124 = vset.pattern.permute.xlu0 10
        %1125 = vperm.xlu0 %1124, %v1047
        %v1126 = vpop.permute.xlu0 %1125
        %v1128 = vmul.f32 %v938, %v1051
        %v1129 = vmul.f32 %v943, %v1056
        %v1130 = vmul.f32 %v948, %v1061
        %v1131 = vmul.f32 %v953, %v1066
        %v1132 = vmul.f32 %v958, %v1071
        %v1133 = vmul.f32 %v963, %v1076
        %v1134 = vmul.f32 %v968, %v1081
        %v1135 = vmul.f32 %v973, %v1086
        %v1136 = vmul.f32 %v978, %v1091
        %v1137 = vmul.f32 %v983, %v1096
        %v1138 = vmul.f32 %v988, %v1101
        %v1139 = vmul.f32 %v993, %v1106
        %v1140 = vmul.f32 %v998, %v1111
        %v1141 = vmul.f32 %v1003, %v1116
        %v1142 = vmul.f32 %v1008, %v1121
        %v1143 = vmul.f32 %v1013, %v1126
        %1144 = vst [vmem:[%s232] sm:$0xff] %v1128
        %1145 = vst [vmem:[%s232 + $0x8] sm:$0xff] %v1129
        %1146 = vst [vmem:[%s232 + $0x10] sm:$0xff] %v1130
        %1147 = vst [vmem:[%s232 + $0x18] sm:$0xff] %v1131
        %1148 = vst [vmem:[%s232 + $0x20] sm:$0xff] %v1132
        %1149 = vst [vmem:[%s232 + $0x28] sm:$0xff] %v1133
        %1150 = vst [vmem:[%s232 + $0x30] sm:$0xff] %v1134
        %1151 = vst [vmem:[%s232 + $0x38] sm:$0xff] %v1135
        %1152 = vst [vmem:[%s232 + $0x40] sm:$0xff] %v1136
        %1153 = vst [vmem:[%s232 + $0x48] sm:$0xff] %v1137
        %1154 = vst [vmem:[%s232 + $0x50] sm:$0xff] %v1138
        %1155 = vst [vmem:[%s232 + $0x58] sm:$0xff] %v1139
        %1156 = vst [vmem:[%s232 + $0x60] sm:$0xff] %v1140
        %1157 = vst [vmem:[%s232 + $0x68] sm:$0xff] %v1141
        %1158 = vst [vmem:[%s232 + $0x70] sm:$0xff] %v1142
        %1159 = vst [vmem:[%s232 + $0x78] sm:$0xff] %v1143
        %s1160 = sand.u32 %s123, 1
        %s1161 = scalar_lea.sflag [#allocation4], %s1160
        %s1162 = sand.u32 %s123, 1
        %s1163 = smul.addr %s1162, 128
        %s1164 = scalar_lea.vmem [#allocation5], %s1163
        // Predicated region
        $region41: #{tpu_custom_call.1} parent=35 // pred_check
          %p1165 = pneg %p133
        $region42: #{tpu_custom_call.1} parent=35 // pred_check_branch
          %1167 = sbr.rel (%p1165) target = $region44
        $region43: #{tpu_custom_call.1} parent=35 // pred_region
          %s1168 = smul.u32 16, %s21
          %s1170 = ssub.s32 2048, 2048
          %1171 = vsyncadd %s1161, %s1170
          %s1172 = smul.addr %s1168, 128
          %s1173 = scalar_lea.hbm %s4, %s1172
          %s1174 = sshll.u32 %s1164, 4
          %s1175 = int_to_ptr.vmem [resolvable:$true] %s1174
          %1180 = dma.vmem_to_hbm [thread:$0]  %s1175, 2048, %s1173, %s1161, 128, 128, 8
        $region44: #{tpu_custom_call.1} parent=35 // pred_fallthru
          _
      $region36: #{tpu_custom_call.1} parent=5 // pred_fallthru
        _
      %p1181 = scmp.le.s32.totalorder 2, %s16
      // Predicated region
      $region45: #{tpu_custom_call.1} parent=5 // pred_check
        %p1182 = pneg %p1181
      $region46: #{tpu_custom_call.1} parent=5 // pred_check_branch
        %1184 = sbr.rel (%p1182) target = $region48
      $region47: #{tpu_custom_call.1} parent=5 // pred_region
        %s1185 = ssub.s32 %s16, 2
        // Predicated region
        $region49: #{tpu_custom_call.1} parent=47 // pred_check
          %p1186 = pneg %p139
        $region50: #{tpu_custom_call.1} parent=47 // pred_check_branch
          %1188 = sbr.rel (%p1186) target = $region52
        $region51: #{tpu_custom_call.1} parent=47 // pred_region
          %s1189 = sand.u32 %s124, 1
          %s1190 = scalar_lea.sflag [#allocation4], %s1189
          %s1191 = sand.u32 %s124, 1
          %s1192 = smul.addr %s1191, 128
          %s1193 = scalar_lea.vmem [#allocation5], %s1192
          %1194 = dma.done %s1190, 2048
        $region52: #{tpu_custom_call.1} parent=47 // pred_fallthru
          _
      $region48: #{tpu_custom_call.1} parent=5 // pred_fallthru
        _
    $region6: #{tpu_custom_call.1} parent=1 // loop_footer
      %s20 = sadd.s32 1, %s16
    $region7: #{tpu_custom_call.1} parent=1 // loop_footer_branch
      %15 = sbr.rel target = $region3
    $region8: #{tpu_custom_call.1} parent=1 // loop_exit
      _
    %1195 = vsyncpa [#allocation3], 1
    %s1196 = scalar_lea.sflag [#allocation3], 1
    %1197 = vsyncpa %s1196, 1
    %1198 = vsyncpa [#allocation4], 1
    %s1199 = scalar_lea.sflag [#allocation4], 1
    %1200 = vsyncpa %s1199, 1

// kernel: tpu_custom_call.1
$region0: #{tpu_custom_call.1}
  #allocation0 [shape = 'u32[]', space=smem, size = 0x4, offset = 0x4, fixed_abs, tag = 'smem constant byte address 0x4 - core index']
  #allocation1 [shape = 'u32[144,128]{1,0:T(1,128)}', space=vmem, size = 0x12000, scoped, tag = 'internal scratch']
  %s0 = inlined_call_operand.vmem [shape: f32[256,128], index: 0, kind: input, shape index: {}]
  %s1 = inlined_call_operand.vmem [shape: f32[1,256], index: 1, kind: input, shape index: {}]
  %s2 = inlined_call_operand.vmem [shape: f32[256,1], index: 2, kind: input, shape index: {}]
  %s3 = inlined_call_operand.hbm [shape: s8[256,256], index: 3, kind: input, shape index: {}]
  %s4 = inlined_call_operand.hbm [shape: f32[256,128], index: 4, kind: output, shape index: {}]
  %s5 = sld [smem:[#allocation0]]
  $region53: #{tpu_custom_call.1} parent=0
    _
  %s7 = ssub.s32 1, %s5
  %s8 = scalar_select 0, %s7, %s5
  $region1: #{tpu_custom_call.1} parent=0
    #allocation2 [shape = 'u8[65536]{0}', space=vmem, size = 0x10000, scoped, tag = 'input window, operand 3']
    #allocation3 [shape = 's32[2]{0}', space=sflag, size = 0x8, scoped, tag = 'scoped memory for tpu_custom_call.1']
    #allocation4 [shape = 's32[2]{0}', space=sflag, size = 0x8, scoped, tag = 'scoped memory for tpu_custom_call.1']
    #allocation5 [shape = 'u8[131072]{0}', space=vmem, size = 0x20000, scoped, tag = 'output window, operand 0']
    %9 = vsyncpa [#allocation3], 0
    %s10 = scalar_lea.sflag [#allocation3], 1
    %11 = vsyncpa %s10, 0
    %12 = vsyncpa [#allocation4], 0
    %s13 = scalar_lea.sflag [#allocation4], 1
    %14 = vsyncpa %s13, 0
    loop: start=0, step=1, limit=4
    $region2: #{tpu_custom_call.1} parent=1 // loop_pre_header
      _
    $region3: #{tpu_custom_call.1} parent=1 // loop_header
      %s16 = sphi 0, %s20
      %p17 = scmp.ge.s32.totalorder %s16, 4
      %s24 = sphi 0, %s24
      %s26 = sphi 0, %s24
      %s27 = sphi 0, %s26
      %s41 = sphi 0, %s27
      %s45 = sphi 0, %s45
      %s47 = sphi 0, %s45
      %s48 = sphi 0, %s47
      %s62 = sphi 0, %s48
      %s68 = sphi 0, %s70
      %s71 = sphi 0, %s68
      %s72 = sphi 0, %s71
      %s88 = sphi 0, %s72
      %s94 = sphi 0, %s96
      %s97 = sphi 0, %s94
      %s98 = sphi 0, %s97
      %s114 = sphi 0, %s98
      %s120 = sphi 0, %s122
      %s123 = sphi 0, %s120
      %s124 = sphi 0, %s123
      %s140 = sphi 0, %s124
    $region4: #{tpu_custom_call.1} parent=1 // loop_header_branch
      %19 = sbr.rel (%p17) target = $region8
    $region5: #{tpu_custom_call.1} parent=1 // loop_body
      %s21 = ssub.s32 %s16, 1
      %s22 = ssub.s32 %s16, 2
      %s23 = sadd.s32 %s16, 1
      %s25 = sadd.s32 %s24, 1
      %p28 = scmp.eq.s32.totalorder %s16, 1
      %p29 = scmp.ne.s32.totalorder %s24, %s26
      %p30 = scmp.eq.s32.totalorder %s16, 0
      %p31 = por %p29, %p30
      %p32 = scmp.ne.s32.totalorder %s24, %s26
      %p33 = scmp.eq.s32.totalorder %s21, 1
      %p34 = por %p32, %p33
      %p35 = scmp.ne.s32.totalorder %s26, %s27
      %p36 = scmp.eq.s32.totalorder %s21, 0
      %p37 = por %p35, %p36
      %p38 = scmp.ne.s32.totalorder %s26, %s27
      %p39 = scmp.eq.s32.totalorder %s22, 1
      %p40 = por %p38, %p39
      %p42 = scmp.ne.s32.totalorder %s27, %s41
      %p43 = scmp.eq.s32.totalorder %s22, 0
      %p44 = por %p42, %p43
      %s46 = sadd.s32 %s45, 1
      %p49 = scmp.eq.s32.totalorder %s16, 1
      %p50 = scmp.ne.s32.totalorder %s45, %s47
      %p51 = scmp.eq.s32.totalorder %s16, 0
      %p52 = por %p50, %p51
      %p53 = scmp.ne.s32.totalorder %s45, %s47
      %p54 = scmp.eq.s32.totalorder %s21, 1
      %p55 = por %p53, %p54
      %p56 = scmp.ne.s32.totalorder %s47, %s48
      %p57 = scmp.eq.s32.totalorder %s21, 0
      %p58 = por %p56, %p57
      %p59 = scmp.ne.s32.totalorder %s47, %s48
      %p60 = scmp.eq.s32.totalorder %s22, 1
      %p61 = por %p59, %p60
      %p63 = scmp.ne.s32.totalorder %s48, %s62
      %p64 = scmp.eq.s32.totalorder %s22, 0
      %p65 = por %p63, %p64
      %s66 = ssub.s32 %s16, %s23
      %p67 = scmp.eq.s32.totalorder %s66, 0
      %s69 = sadd.s32 %s68, 1
      %s70 = scalar_select %p67, %s68, %s69
      %p73 = pneg %p67
      %p74 = scmp.eq.s32.totalorder %s16, 1
      %p75 = por %p73, %p74
      %p76 = scmp.ne.s32.totalorder %s68, %s71
      %p77 = scmp.eq.s32.totalorder %s16, 0
      %p78 = por %p76, %p77
      %p79 = scmp.ne.s32.totalorder %s68, %s71
      %p80 = scmp.eq.s32.totalorder %s21, 1
      %p81 = por %p79, %p80
      %p82 = scmp.ne.s32.totalorder %s71, %s72
      %p83 = scmp.eq.s32.totalorder %s21, 0
      %p84 = por %p82, %p83
      %p85 = scmp.ne.s32.totalorder %s71, %s72
      %p86 = scmp.eq.s32.totalorder %s22, 1
      %p87 = por %p85, %p86
      %p89 = scmp.ne.s32.totalorder %s72, %s88
      %p90 = scmp.eq.s32.totalorder %s22, 0
      %p91 = por %p89, %p90
      %s92 = ssub.s32 %s16, %s23
      %p93 = scmp.eq.s32.totalorder %s92, 0
      %s95 = sadd.s32 %s94, 1
      %s96 = scalar_select %p93, %s94, %s95
      %p99 = pneg %p93
      %p100 = scmp.eq.s32.totalorder %s16, 1
      %p101 = por %p99, %p100
      %p102 = scmp.ne.s32.totalorder %s94, %s97
      %p103 = scmp.eq.s32.totalorder %s16, 0
      %p104 = por %p102, %p103
      %p105 = scmp.ne.s32.totalorder %s94, %s97
      %p106 = scmp.eq.s32.totalorder %s21, 1
      %p107 = por %p105, %p106
      %p108 = scmp.ne.s32.totalorder %s97, %s98
      %p109 = scmp.eq.s32.totalorder %s21, 0
      %p110 = por %p108, %p109
      %p111 = scmp.ne.s32.totalorder %s97, %s98
      %p112 = scmp.eq.s32.totalorder %s22, 1
      %p113 = por %p111, %p112
      %p115 = scmp.ne.s32.totalorder %s98, %s114
      %p116 = scmp.eq.s32.totalorder %s22, 0
      %p117 = por %p115, %p116
      %s118 = ssub.s32 %s16, %s23
      %p119 = scmp.eq.s32.totalorder %s118, 0
      %s121 = sadd.s32 %s120, 1
      %s122 = scalar_select %p119, %s120, %s121
      %p125 = pneg %p119
      %p126 = scmp.eq.s32.totalorder %s16, 1
      %p127 = por %p125, %p126
      %p128 = scmp.ne.s32.totalorder %s120, %s123
      %p129 = scmp.eq.s32.totalorder %s16, 0
      %p130 = por %p128, %p129
      %p131 = scmp.ne.s32.totalorder %s120, %s123
      %p132 = scmp.eq.s32.totalorder %s21, 1
      %p133 = por %p131, %p132
      %p134 = scmp.ne.s32.totalorder %s123, %s124
      %p135 = scmp.eq.s32.totalorder %s21, 0
      %p136 = por %p134, %p135
      %p137 = scmp.ne.s32.totalorder %s123, %s124
      %p138 = scmp.eq.s32.totalorder %s22, 1
      %p139 = por %p137, %p138
      %p141 = scmp.ne.s32.totalorder %s124, %s140
      %p142 = scmp.eq.s32.totalorder %s22, 0
      %p143 = por %p141, %p142
      %p144 = scmp.le.s32.totalorder 1, %s16
      %p145 = scmp.lt.s32.totalorder %s16, 3
      %p146 = pnand %p144, %p145
      %p147 = pneg %p146
      // Predicated region
      $region9: #{tpu_custom_call.1} parent=5 // pred_check
        _
      $region10: #{tpu_custom_call.1} parent=5 // pred_check_branch
        %149 = sbr.rel (%p146) target = $region12
      $region11: #{tpu_custom_call.1} parent=5 // pred_region
        %s150 = ssub.s32 %s16, 1
        // Predicated region
        $region13: #{tpu_custom_call.1} parent=11 // pred_check
          %p151 = pneg %p37
        $region14: #{tpu_custom_call.1} parent=11 // pred_check_branch
          %153 = sbr.rel (%p151) target = $region16
        $region15: #{tpu_custom_call.1} parent=11 // pred_region
          _
        $region16: #{tpu_custom_call.1} parent=11 // pred_fallthru
          _
        // Predicated region
        $region17: #{tpu_custom_call.1} parent=11 // pred_check
          %p154 = pneg %p58
        $region18: #{tpu_custom_call.1} parent=11 // pred_check_branch
          %156 = sbr.rel (%p154) target = $region20
        $region19: #{tpu_custom_call.1} parent=11 // pred_region
          _
        $region20: #{tpu_custom_call.1} parent=11 // pred_fallthru
          _
      $region12: #{tpu_custom_call.1} parent=5 // pred_fallthru
        _
      %p157 = scmp.lt.s32.totalorder %s16, 2
      // Predicated region
      $region21: #{tpu_custom_call.1} parent=5 // pred_check
        %p158 = pneg %p157
      $region22: #{tpu_custom_call.1} parent=5 // pred_check_branch
        %160 = sbr.rel (%p158) target = $region24
      $region23: #{tpu_custom_call.1} parent=5 // pred_region
        // Predicated region
        $region25: #{tpu_custom_call.1} parent=23 // pred_check
          %p161 = pneg %p78
        $region26: #{tpu_custom_call.1} parent=23 // pred_check_branch
          %163 = sbr.rel (%p161) target = $region28
        $region27: #{tpu_custom_call.1} parent=23 // pred_region
          %s164 = smul.u32 16, %s16
          %p165 = scmp.lt.s32.totalorder %s164, 31
          %s166 = scalar_select %p165, %s164, 31
          %s167 = smul.addr %s166, 8
          %s168 = scalar_lea.vmem %s2, %s167
          %s169 = smul.u32 16, %s16
        $region28: #{tpu_custom_call.1} parent=23 // pred_fallthru
          _
        // Predicated region
        $region29: #{tpu_custom_call.1} parent=23 // pred_check
          %p170 = pneg %p104
        $region30: #{tpu_custom_call.1} parent=23 // pred_check_branch
          %172 = sbr.rel (%p170) target = $region32
        $region31: #{tpu_custom_call.1} parent=23 // pred_region
          %s173 = sand.u32 %s94, 1
          %s174 = scalar_lea.sflag [#allocation3], %s173
          %s175 = sand.u32 %s94, 1
          %s176 = smul.addr %s175, 64
          %s177 = scalar_lea.vmem [#allocation2], %s176
          %s178 = smul.u32 4, %s16
          %s180 = ssub.s32 1024, 1024
          %181 = vsyncadd %s174, %s180
          %s182 = smul.addr %s178, 2
          %s183 = smul.addr %s182, 128
          %s184 = scalar_lea.hbm %s3, %s183
          %s185 = sshll.u32 %s177, 4
          %s186 = int_to_ptr.vmem [resolvable:$true] %s185
          %191 = dma.hbm_to_vmem [thread:$0]  %s184, 1024, %s186, %s174, 256, 256, 16
        $region32: #{tpu_custom_call.1} parent=23 // pred_fallthru
          _
      $region24: #{tpu_custom_call.1} parent=5 // pred_fallthru
        _
      %p192 = scmp.le.s32.totalorder 1, %s16
      %p193 = scmp.lt.s32.totalorder %s16, 3
      %p194 = pnand %p192, %p193
      %p195 = pneg %p194
      // Predicated region
      $region33: #{tpu_custom_call.1} parent=5 // pred_check
        _
      $region34: #{tpu_custom_call.1} parent=5 // pred_check_branch
        %197 = sbr.rel (%p194) target = $region36
      $region35: #{tpu_custom_call.1} parent=5 // pred_region
        %s198 = ssub.s32 %s16, 1
        %s199 = sand.u32 %s97, 1
        %s200 = scalar_lea.sflag [#allocation3], %s199
        %s201 = sand.u32 %s97, 1
        %s202 = smul.addr %s201, 64
        %s203 = scalar_lea.vmem [#allocation2], %s202
        // Predicated region
        $region37: #{tpu_custom_call.1} parent=35 // pred_check
          %p204 = pneg %p110
        $region38: #{tpu_custom_call.1} parent=35 // pred_check_branch
          %206 = sbr.rel (%p204) target = $region40
        $region39: #{tpu_custom_call.1} parent=35 // pred_region
          %207 = dma.done %s200, 1024
        $region40: #{tpu_custom_call.1} parent=35 // pred_fallthru
          _
        %p208 = pneg %p37
        %p209 = pneg %p34
        %p210 = pneg %p58
        %p211 = pneg %p55
        %s212 = smul.u32 16, %s21
        %p213 = scmp.lt.s32.totalorder %s212, 31
        %s214 = scalar_select %p213, %s212, 31
        %s215 = smul.addr %s214, 8
        %s216 = scalar_lea.vmem %s2, %s215
        %p217 = pneg %p84
        %p218 = pneg %p81
        %s219 = sand.u32 %s97, 1
        %s220 = scalar_lea.sflag [#allocation3], %s219
        %s221 = sand.u32 %s97, 1
        %s222 = smul.addr %s221, 64
        %s223 = scalar_lea.vmem [#allocation2], %s222
        %p224 = pneg %p110
        %p225 = pneg %p107
        %p226 = pneg %p136
        %p227 = pneg %p133
        %s228 = sand.u32 %s123, 1
        %s229 = scalar_lea.sflag [#allocation4], %s228
        %s230 = sand.u32 %s123, 1
        %s231 = smul.addr %s230, 128
        %s232 = scalar_lea.vmem [#allocation5], %s231
        %s233 = smul.u32 16, %s21
        %p234 = scmp.lt.s32.totalorder %s233, 31
        %s235 = scalar_select %p234, %s233, 31
        %s236 = smul.addr %s235, 8
        %s237 = scalar_lea.vmem %s2, %s236
        %s238 = smul.u32 16, %s21
        %s239 = smul.u32 4, %s21
        %s240 = smul.u32 16, %s21
        %v243 = vld [vmem:[%s237] sm:$0xff]
        %v244 = vld [vmem:[%s237 + $0x8] sm:$0xff]
        %v245 = vld [vmem:[%s237 + $0x10] sm:$0xff]
        %v246 = vld [vmem:[%s237 + $0x18] sm:$0xff]
        %v247 = vld [vmem:[%s237 + $0x20] sm:$0xff]
        %v248 = vld [vmem:[%s237 + $0x28] sm:$0xff]
        %v249 = vld [vmem:[%s237 + $0x30] sm:$0xff]
        %v250 = vld [vmem:[%s237 + $0x38] sm:$0xff]
        %v251 = vld [vmem:[%s237 + $0x40] sm:$0xff]
        %v252 = vld [vmem:[%s237 + $0x48] sm:$0xff]
        %v253 = vld [vmem:[%s237 + $0x50] sm:$0xff]
        %v254 = vld [vmem:[%s237 + $0x58] sm:$0xff]
        %v255 = vld [vmem:[%s237 + $0x60] sm:$0xff]
        %v256 = vld [vmem:[%s237 + $0x68] sm:$0xff]
        %v257 = vld [vmem:[%s237 + $0x70] sm:$0xff]
        %v258 = vld [vmem:[%s237 + $0x78] sm:$0xff]
        %v259 = vld [vmem:[%s1] sm:$0x3]
        %261 = vset.pattern.permute.xlu0 0
        %262 = vperm.xlu0 %261, %v243
        %v263 = vpop.permute.xlu0 %262
        %266 = vset.pattern.permute.xlu0 0
        %267 = vperm.xlu0 %266, %v244
        %v268 = vpop.permute.xlu0 %267
        %271 = vset.pattern.permute.xlu0 0
        %272 = vperm.xlu0 %271, %v245
        %v273 = vpop.permute.xlu0 %272
        %276 = vset.pattern.permute.xlu0 0
        %277 = vperm.xlu0 %276, %v246
        %v278 = vpop.permute.xlu0 %277
        %281 = vset.pattern.permute.xlu0 0
        %282 = vperm.xlu0 %281, %v247
        %v283 = vpop.permute.xlu0 %282
        %286 = vset.pattern.permute.xlu0 0
        %287 = vperm.xlu0 %286, %v248
        %v288 = vpop.permute.xlu0 %287
        %291 = vset.pattern.permute.xlu0 0
        %292 = vperm.xlu0 %291, %v249
        %v293 = vpop.permute.xlu0 %292
        %296 = vset.pattern.permute.xlu0 0
        %297 = vperm.xlu0 %296, %v250
        %v298 = vpop.permute.xlu0 %297
        %301 = vset.pattern.permute.xlu0 0
        %302 = vperm.xlu0 %301, %v251
        %v303 = vpop.permute.xlu0 %302
        %306 = vset.pattern.permute.xlu0 0
        %307 = vperm.xlu0 %306, %v252
        %v308 = vpop.permute.xlu0 %307
        %311 = vset.pattern.permute.xlu0 0
        %312 = vperm.xlu0 %311, %v253
        %v313 = vpop.permute.xlu0 %312
        %316 = vset.pattern.permute.xlu0 0
        %317 = vperm.xlu0 %316, %v254
        %v318 = vpop.permute.xlu0 %317
        %321 = vset.pattern.permute.xlu0 0
        %322 = vperm.xlu0 %321, %v255
        %v323 = vpop.permute.xlu0 %322
        %326 = vset.pattern.permute.xlu0 0
        %327 = vperm.xlu0 %326, %v256
        %v328 = vpop.permute.xlu0 %327
        %331 = vset.pattern.permute.xlu0 0
        %332 = vperm.xlu0 %331, %v257
        %v333 = vpop.permute.xlu0 %332
        %336 = vset.pattern.permute.xlu0 0
        %337 = vperm.xlu0 %336, %v258
        %v338 = vpop.permute.xlu0 %337
        %v341 = vlaneseq
        %v342 = vshrl.u32 %v341, 7
        %v343 = vsub.s32 0, %v342
        %v344 = vrot.slane %v259, %v343
        %v345 = vlaneseq
        %v346 = vshrl.u32 %v345, 7
        %v347 = vsub.s32 1, %v346
        %v348 = vrot.slane %v259, %v347
        %v351 = vadd.f32 %v263, %v344
        %v352 = vadd.f32 %v263, %v348
        %v353 = vadd.f32 %v268, %v344
        %v354 = vadd.f32 %v268, %v348
        %v355 = vadd.f32 %v273, %v344
        %v356 = vadd.f32 %v273, %v348
        %v357 = vadd.f32 %v278, %v344
        %v358 = vadd.f32 %v278, %v348
        %v359 = vadd.f32 %v283, %v344
        %v360 = vadd.f32 %v283, %v348
        %v361 = vadd.f32 %v288, %v344
        %v362 = vadd.f32 %v288, %v348
        %v363 = vadd.f32 %v293, %v344
        %v364 = vadd.f32 %v293, %v348
        %v365 = vadd.f32 %v298, %v344
        %v366 = vadd.f32 %v298, %v348
        %v367 = vadd.f32 %v303, %v344
        %v368 = vadd.f32 %v303, %v348
        %v369 = vadd.f32 %v308, %v344
        %v370 = vadd.f32 %v308, %v348
        %v371 = vadd.f32 %v313, %v344
        %v372 = vadd.f32 %v313, %v348
        %v373 = vadd.f32 %v318, %v344
        %v374 = vadd.f32 %v318, %v348
        %v375 = vadd.f32 %v323, %v344
        %v376 = vadd.f32 %v323, %v348
        %v377 = vadd.f32 %v328, %v344
        %v378 = vadd.f32 %v328, %v348
        %v379 = vadd.f32 %v333, %v344
        %v380 = vadd.f32 %v333, %v348
        %v381 = vadd.f32 %v338, %v344
        %v382 = vadd.f32 %v338, %v348
        %vm383 = vcmp.gt.f32.partialorder %v351, 0.0
        %vm384 = vcmp.gt.f32.partialorder %v352, 0.0
        %vm385 = vcmp.gt.f32.partialorder %v353, 0.0
        %vm386 = vcmp.gt.f32.partialorder %v354, 0.0
        %vm387 = vcmp.gt.f32.partialorder %v355, 0.0
        %vm388 = vcmp.gt.f32.partialorder %v356, 0.0
        %vm389 = vcmp.gt.f32.partialorder %v357, 0.0
        %vm390 = vcmp.gt.f32.partialorder %v358, 0.0
        %vm391 = vcmp.gt.f32.partialorder %v359, 0.0
        %vm392 = vcmp.gt.f32.partialorder %v360, 0.0
        %vm393 = vcmp.gt.f32.partialorder %v361, 0.0
        %vm394 = vcmp.gt.f32.partialorder %v362, 0.0
        %vm395 = vcmp.gt.f32.partialorder %v363, 0.0
        %vm396 = vcmp.gt.f32.partialorder %v364, 0.0
        %vm397 = vcmp.gt.f32.partialorder %v365, 0.0
        %vm398 = vcmp.gt.f32.partialorder %v366, 0.0
        %vm399 = vcmp.gt.f32.partialorder %v367, 0.0
        %vm400 = vcmp.gt.f32.partialorder %v368, 0.0
        %vm401 = vcmp.gt.f32.partialorder %v369, 0.0
        %vm402 = vcmp.gt.f32.partialorder %v370, 0.0
        %vm403 = vcmp.gt.f32.partialorder %v371, 0.0
        %vm404 = vcmp.gt.f32.partialorder %v372, 0.0
        %vm405 = vcmp.gt.f32.partialorder %v373, 0.0
        %vm406 = vcmp.gt.f32.partialorder %v374, 0.0
        %vm407 = vcmp.gt.f32.partialorder %v375, 0.0
        %vm408 = vcmp.gt.f32.partialorder %v376, 0.0
        %vm409 = vcmp.gt.f32.partialorder %v377, 0.0
        %vm410 = vcmp.gt.f32.partialorder %v378, 0.0
        %vm411 = vcmp.gt.f32.partialorder %v379, 0.0
        %vm412 = vcmp.gt.f32.partialorder %v380, 0.0
        %vm413 = vcmp.gt.f32.partialorder %v381, 0.0
        %vm414 = vcmp.gt.f32.partialorder %v382, 0.0
        %v415 = vmul.f32 %v351, 0.01
        %v416 = vmul.f32 %v352, 0.01
        %v417 = vmul.f32 %v353, 0.01
        %v418 = vmul.f32 %v354, 0.01
        %v419 = vmul.f32 %v355, 0.01
        %v420 = vmul.f32 %v356, 0.01
        %v421 = vmul.f32 %v357, 0.01
        %v422 = vmul.f32 %v358, 0.01
        %v423 = vmul.f32 %v359, 0.01
        %v424 = vmul.f32 %v360, 0.01
        %v425 = vmul.f32 %v361, 0.01
        %v426 = vmul.f32 %v362, 0.01
        %v427 = vmul.f32 %v363, 0.01
        %v428 = vmul.f32 %v364, 0.01
        %v429 = vmul.f32 %v365, 0.01
        %v430 = vmul.f32 %v366, 0.01
        %v431 = vmul.f32 %v367, 0.01
        %v432 = vmul.f32 %v368, 0.01
        %v433 = vmul.f32 %v369, 0.01
        %v434 = vmul.f32 %v370, 0.01
        %v435 = vmul.f32 %v371, 0.01
        %v436 = vmul.f32 %v372, 0.01
        %v437 = vmul.f32 %v373, 0.01
        %v438 = vmul.f32 %v374, 0.01
        %v439 = vmul.f32 %v375, 0.01
        %v440 = vmul.f32 %v376, 0.01
        %v441 = vmul.f32 %v377, 0.01
        %v442 = vmul.f32 %v378, 0.01
        %v443 = vmul.f32 %v379, 0.01
        %v444 = vmul.f32 %v380, 0.01
        %v445 = vmul.f32 %v381, 0.01
        %v446 = vmul.f32 %v382, 0.01
        %v447 = vsel %vm383, %v351, %v415
        %v448 = vsel %vm384, %v352, %v416
        %v449 = vsel %vm385, %v353, %v417
        %v450 = vsel %vm386, %v354, %v418
        %v451 = vsel %vm387, %v355, %v419
        %v452 = vsel %vm388, %v356, %v420
        %v453 = vsel %vm389, %v357, %v421
        %v454 = vsel %vm390, %v358, %v422
        %v455 = vsel %vm391, %v359, %v423
        %v456 = vsel %vm392, %v360, %v424
        %v457 = vsel %vm393, %v361, %v425
        %v458 = vsel %vm394, %v362, %v426
        %v459 = vsel %vm395, %v363, %v427
        %v460 = vsel %vm396, %v364, %v428
        %v461 = vsel %vm397, %v365, %v429
        %v462 = vsel %vm398, %v366, %v430
        %v463 = vsel %vm399, %v367, %v431
        %v464 = vsel %vm400, %v368, %v432
        %v465 = vsel %vm401, %v369, %v433
        %v466 = vsel %vm402, %v370, %v434
        %v467 = vsel %vm403, %v371, %v435
        %v468 = vsel %vm404, %v372, %v436
        %v469 = vsel %vm405, %v373, %v437
        %v470 = vsel %vm406, %v374, %v438
        %v471 = vsel %vm407, %v375, %v439
        %v472 = vsel %vm408, %v376, %v440
        %v473 = vsel %vm409, %v377, %v441
        %v474 = vsel %vm410, %v378, %v442
        %v475 = vsel %vm411, %v379, %v443
        %v476 = vsel %vm412, %v380, %v444
        %v477 = vsel %vm413, %v381, %v445
        %v478 = vsel %vm414, %v382, %v446
        %v479 = vld [vmem:[%s203] sm:$0xff]
        %v480 = vld [vmem:[%s203 + $0x8] sm:$0xff]
        %v481 = vld [vmem:[%s203 + $0x10] sm:$0xff]
        %v482 = vld [vmem:[%s203 + $0x18] sm:$0xff]
        %v483 = vld [vmem:[%s203 + $0x20] sm:$0xff]
        %v484 = vld [vmem:[%s203 + $0x28] sm:$0xff]
        %v485 = vld [vmem:[%s203 + $0x30] sm:$0xff]
        %v486 = vld [vmem:[%s203 + $0x38] sm:$0xff]
        %vm487 = vnez %v479
        %vm488 = vnez %v480
        %vm489 = vnez %v481
        %vm490 = vnez %v482
        %vm491 = vnez %v483
        %vm492 = vnez %v484
        %vm493 = vnez %v485
        %vm494 = vnez %v486
        %v495 = vsel %vm487, 16843009, 0
        %v496 = vsel %vm488, 16843009, 0
        %v497 = vsel %vm489, 16843009, 0
        %v498 = vsel %vm490, 16843009, 0
        %v499 = vsel %vm491, 16843009, 0
        %v500 = vsel %vm492, 16843009, 0
        %v501 = vsel %vm493, 16843009, 0
        %v502 = vsel %vm494, 16843009, 0
        %v503 = vunpack.c.0.s8 %v495
        %v504 = vunpack.c.0.s8 %v496
        %v505 = vunpack.c.1.s8 %v495
        %v506 = vunpack.c.1.s8 %v496
        %v507 = vunpack.c.2.s8 %v495
        %v508 = vunpack.c.2.s8 %v496
        %v509 = vunpack.c.3.s8 %v495
        %v510 = vunpack.c.3.s8 %v496
        %v511 = vunpack.c.0.s8 %v497
        %v512 = vunpack.c.0.s8 %v498
        %v513 = vunpack.c.1.s8 %v497
        %v514 = vunpack.c.1.s8 %v498
        %v515 = vunpack.c.2.s8 %v497
        %v516 = vunpack.c.2.s8 %v498
        %v517 = vunpack.c.3.s8 %v497
        %v518 = vunpack.c.3.s8 %v498
        %v519 = vunpack.c.0.s8 %v499
        %v520 = vunpack.c.0.s8 %v500
        %v521 = vunpack.c.1.s8 %v499
        %v522 = vunpack.c.1.s8 %v500
        %v523 = vunpack.c.2.s8 %v499
        %v524 = vunpack.c.2.s8 %v500
        %v525 = vunpack.c.3.s8 %v499
        %v526 = vunpack.c.3.s8 %v500
        %v527 = vunpack.c.0.s8 %v501
        %v528 = vunpack.c.0.s8 %v502
        %v529 = vunpack.c.1.s8 %v501
        %v530 = vunpack.c.1.s8 %v502
        %v531 = vunpack.c.2.s8 %v501
        %v532 = vunpack.c.2.s8 %v502
        %v533 = vunpack.c.3.s8 %v501
        %v534 = vunpack.c.3.s8 %v502
        %v535 = vpack.c.b16 %v504, %v503
        %v536 = vpack.c.b8 %v535, %v535
        %v537 = vpack.c.b16 %v506, %v505
        %v538 = vpack.c.b8 %v537, %v537
        %v539 = vpack.c.b16 %v508, %v507
        %v540 = vpack.c.b8 %v539, %v539
        %v541 = vpack.c.b16 %v510, %v509
        %v542 = vpack.c.b8 %v541, %v541
        %v543 = vpack.c.b16 %v512, %v511
        %v544 = vpack.c.b8 %v543, %v543
        %v545 = vpack.c.b16 %v514, %v513
        %v546 = vpack.c.b8 %v545, %v545
        %v547 = vpack.c.b16 %v516, %v515
        %v548 = vpack.c.b8 %v547, %v547
        %v549 = vpack.c.b16 %v518, %v517
        %v550 = vpack.c.b8 %v549, %v549
        %v551 = vpack.c.b16 %v520, %v519
        %v552 = vpack.c.b8 %v551, %v551
        %v553 = vpack.c.b16 %v522, %v521
        %v554 = vpack.c.b8 %v553, %v553
        %v555 = vpack.c.b16 %v524, %v523
        %v556 = vpack.c.b8 %v555, %v555
        %v557 = vpack.c.b16 %v526, %v525
        %v558 = vpack.c.b8 %v557, %v557
        %v559 = vpack.c.b16 %v528, %v527
        %v560 = vpack.c.b8 %v559, %v559
        %v561 = vpack.c.b16 %v530, %v529
        %v562 = vpack.c.b8 %v561, %v561
        %v563 = vpack.c.b16 %v532, %v531
        %v564 = vpack.c.b8 %v563, %v563
        %v565 = vpack.c.b16 %v534, %v533
        %v566 = vpack.c.b8 %v565, %v565
        %vm567 = vnez %v536
        %vm568 = vnez %v538
        %vm569 = vnez %v540
        %vm570 = vnez %v542
        %vm571 = vnez %v544
        %vm572 = vnez %v546
        %vm573 = vnez %v548
        %vm574 = vnez %v550
        %vm575 = vnez %v552
        %vm576 = vnez %v554
        %vm577 = vnez %v556
        %vm578 = vnez %v558
        %vm579 = vnez %v560
        %vm580 = vnez %v562
        %vm581 = vnez %v564
        %vm582 = vnez %v566
        %v583 = vsel %vm567, 16843009, 0
        %v584 = vsel %vm568, 16843009, 0
        %v585 = vsel %vm569, 16843009, 0
        %v586 = vsel %vm570, 16843009, 0
        %v587 = vsel %vm571, 16843009, 0
        %v588 = vsel %vm572, 16843009, 0
        %v589 = vsel %vm573, 16843009, 0
        %v590 = vsel %vm574, 16843009, 0
        %v591 = vsel %vm575, 16843009, 0
        %v592 = vsel %vm576, 16843009, 0
        %v593 = vsel %vm577, 16843009, 0
        %v594 = vsel %vm578, 16843009, 0
        %v595 = vsel %vm579, 16843009, 0
        %v596 = vsel %vm580, 16843009, 0
        %v597 = vsel %vm581, 16843009, 0
        %v598 = vsel %vm582, 16843009, 0
        %v599 = vunpack.c.0.s8 %v583
        %v600 = vunpack.c.1.s8 %v583
        %v601 = vunpack.c.0.s8 %v584
        %v602 = vunpack.c.1.s8 %v584
        %v603 = vunpack.c.0.s8 %v585
        %v604 = vunpack.c.1.s8 %v585
        %v605 = vunpack.c.0.s8 %v586
        %v606 = vunpack.c.1.s8 %v586
        %v607 = vunpack.c.0.s8 %v587
        %v608 = vunpack.c.1.s8 %v587
        %v609 = vunpack.c.0.s8 %v588
        %v610 = vunpack.c.1.s8 %v588
        %v611 = vunpack.c.0.s8 %v589
        %v612 = vunpack.c.1.s8 %v589
        %v613 = vunpack.c.0.s8 %v590
        %v614 = vunpack.c.1.s8 %v590
        %v615 = vunpack.c.0.s8 %v591
        %v616 = vunpack.c.1.s8 %v591
        %v617 = vunpack.c.0.s8 %v592
        %v618 = vunpack.c.1.s8 %v592
        %v619 = vunpack.c.0.s8 %v593
        %v620 = vunpack.c.1.s8 %v593
        %v621 = vunpack.c.0.s8 %v594
        %v622 = vunpack.c.1.s8 %v594
        %v623 = vunpack.c.0.s8 %v595
        %v624 = vunpack.c.1.s8 %v595
        %v625 = vunpack.c.0.s8 %v596
        %v626 = vunpack.c.1.s8 %v596
        %v627 = vunpack.c.0.s8 %v597
        %v628 = vunpack.c.1.s8 %v597
        %v629 = vunpack.c.0.s8 %v598
        %v630 = vunpack.c.1.s8 %v598
        %vm631 = vcmp.ne.s32.totalorder %v599, 0
        %vm632 = vcmp.ne.s32.totalorder %v600, 0
        %vm633 = vcmp.ne.s32.totalorder %v601, 0
        %vm634 = vcmp.ne.s32.totalorder %v602, 0
        %vm635 = vcmp.ne.s32.totalorder %v603, 0
        %vm636 = vcmp.ne.s32.totalorder %v604, 0
        %vm637 = vcmp.ne.s32.totalorder %v605, 0
        %vm638 = vcmp.ne.s32.totalorder %v606, 0
        %vm639 = vcmp.ne.s32.totalorder %v607, 0
        %vm640 = vcmp.ne.s32.totalorder %v608, 0
        %vm641 = vcmp.ne.s32.totalorder %v609, 0
        %vm642 = vcmp.ne.s32.totalorder %v610, 0
        %vm643 = vcmp.ne.s32.totalorder %v611, 0
        %vm644 = vcmp.ne.s32.totalorder %v612, 0
        %vm645 = vcmp.ne.s32.totalorder %v613, 0
        %vm646 = vcmp.ne.s32.totalorder %v614, 0
        %vm647 = vcmp.ne.s32.totalorder %v615, 0
        %vm648 = vcmp.ne.s32.totalorder %v616, 0
        %vm649 = vcmp.ne.s32.totalorder %v617, 0
        %vm650 = vcmp.ne.s32.totalorder %v618, 0
        %vm651 = vcmp.ne.s32.totalorder %v619, 0
        %vm652 = vcmp.ne.s32.totalorder %v620, 0
        %vm653 = vcmp.ne.s32.totalorder %v621, 0
        %vm654 = vcmp.ne.s32.totalorder %v622, 0
        %vm655 = vcmp.ne.s32.totalorder %v623, 0
        %vm656 = vcmp.ne.s32.totalorder %v624, 0
        %vm657 = vcmp.ne.s32.totalorder %v625, 0
        %vm658 = vcmp.ne.s32.totalorder %v626, 0
        %vm659 = vcmp.ne.s32.totalorder %v627, 0
        %vm660 = vcmp.ne.s32.totalorder %v628, 0
        %vm661 = vcmp.ne.s32.totalorder %v629, 0
        %vm662 = vcmp.ne.s32.totalorder %v630, 0
        %v663 = vsel %vm631, %v447, -1e+30
        %v664 = vsel %vm632, %v448, -1e+30
        %v665 = vsel %vm633, %v449, -1e+30
        %v666 = vsel %vm634, %v450, -1e+30
        %v667 = vsel %vm635, %v451, -1e+30
        %v668 = vsel %vm636, %v452, -1e+30
        %v669 = vsel %vm637, %v453, -1e+30
        %v670 = vsel %vm638, %v454, -1e+30
        %v671 = vsel %vm639, %v455, -1e+30
        %v672 = vsel %vm640, %v456, -1e+30
        %v673 = vsel %vm641, %v457, -1e+30
        %v674 = vsel %vm642, %v458, -1e+30
        %v675 = vsel %vm643, %v459, -1e+30
        %v676 = vsel %vm644, %v460, -1e+30
        %v677 = vsel %vm645, %v461, -1e+30
        %v678 = vsel %vm646, %v462, -1e+30
        %v679 = vsel %vm647, %v463, -1e+30
        %v680 = vsel %vm648, %v464, -1e+30
        %v681 = vsel %vm649, %v465, -1e+30
        %v682 = vsel %vm650, %v466, -1e+30
        %v683 = vsel %vm651, %v467, -1e+30
        %v684 = vsel %vm652, %v468, -1e+30
        %v685 = vsel %vm653, %v469, -1e+30
        %v686 = vsel %vm654, %v470, -1e+30
        %v687 = vsel %vm655, %v471, -1e+30
        %v688 = vsel %vm656, %v472, -1e+30
        %v689 = vsel %vm657, %v473, -1e+30
        %v690 = vsel %vm658, %v474, -1e+30
        %v691 = vsel %vm659, %v475, -1e+30
        %v692 = vsel %vm660, %v476, -1e+30
        %v693 = vsel %vm661, %v477, -1e+30
        %v694 = vsel %vm662, %v478, -1e+30
        %v695 = vmax.f32 %v663, %v664
        %696 = vmax.xlane.f32.xlu0 %v695
        %v697 = vpop.xlane.xlu0 %696
        %v698 = vmax.f32 %v665, %v666
        %699 = vmax.xlane.f32.xlu0 %v698
        %v700 = vpop.xlane.xlu0 %699
        %v701 = vmax.f32 %v667, %v668
        %702 = vmax.xlane.f32.xlu0 %v701
        %v703 = vpop.xlane.xlu0 %702
        %v704 = vmax.f32 %v669, %v670
        %705 = vmax.xlane.f32.xlu0 %v704
        %v706 = vpop.xlane.xlu0 %705
        %v707 = vmax.f32 %v671, %v672
        %708 = vmax.xlane.f32.xlu0 %v707
        %v709 = vpop.xlane.xlu0 %708
        %v710 = vmax.f32 %v673, %v674
        %711 = vmax.xlane.f32.xlu0 %v710
        %v712 = vpop.xlane.xlu0 %711
        %v713 = vmax.f32 %v675, %v676
        %714 = vmax.xlane.f32.xlu0 %v713
        %v715 = vpop.xlane.xlu0 %714
        %v716 = vmax.f32 %v677, %v678
        %717 = vmax.xlane.f32.xlu0 %v716
        %v718 = vpop.xlane.xlu0 %717
        %v719 = vmax.f32 %v679, %v680
        %720 = vmax.xlane.f32.xlu0 %v719
        %v721 = vpop.xlane.xlu0 %720
        %v722 = vmax.f32 %v681, %v682
        %723 = vmax.xlane.f32.xlu0 %v722
        %v724 = vpop.xlane.xlu0 %723
        %v725 = vmax.f32 %v683, %v684
        %726 = vmax.xlane.f32.xlu0 %v725
        %v727 = vpop.xlane.xlu0 %726
        %v728 = vmax.f32 %v685, %v686
        %729 = vmax.xlane.f32.xlu0 %v728
        %v730 = vpop.xlane.xlu0 %729
        %v731 = vmax.f32 %v687, %v688
        %732 = vmax.xlane.f32.xlu0 %v731
        %v733 = vpop.xlane.xlu0 %732
        %v734 = vmax.f32 %v689, %v690
        %735 = vmax.xlane.f32.xlu0 %v734
        %v736 = vpop.xlane.xlu0 %735
        %v737 = vmax.f32 %v691, %v692
        %738 = vmax.xlane.f32.xlu0 %v737
        %v739 = vpop.xlane.xlu0 %738
        %v740 = vmax.f32 %v693, %v694
        %741 = vmax.xlane.f32.xlu0 %v740
        %v742 = vpop.xlane.xlu0 %741
        %v743 = vsub.f32 %v663, %v697
        %v744 = vsub.f32 %v664, %v697
        %v745 = vsub.f32 %v665, %v700
        %v746 = vsub.f32 %v666, %v700
        %v747 = vsub.f32 %v667, %v703
        %v748 = vsub.f32 %v668, %v703
        %v749 = vsub.f32 %v669, %v706
        %v750 = vsub.f32 %v670, %v706
        %v751 = vsub.f32 %v671, %v709
        %v752 = vsub.f32 %v672, %v709
        %v753 = vsub.f32 %v673, %v712
        %v754 = vsub.f32 %v674, %v712
        %v755 = vsub.f32 %v675, %v715
        %v756 = vsub.f32 %v676, %v715
        %v757 = vsub.f32 %v677, %v718
        %v758 = vsub.f32 %v678, %v718
        %v759 = vsub.f32 %v679, %v721
        %v760 = vsub.f32 %v680, %v721
        %v761 = vsub.f32 %v681, %v724
        %v762 = vsub.f32 %v682, %v724
        %v763 = vsub.f32 %v683, %v727
        %v764 = vsub.f32 %v684, %v727
        %v765 = vsub.f32 %v685, %v730
        %v766 = vsub.f32 %v686, %v730
        %v767 = vsub.f32 %v687, %v733
        %v768 = vsub.f32 %v688, %v733
        %v769 = vsub.f32 %v689, %v736
        %v770 = vsub.f32 %v690, %v736
        %v771 = vsub.f32 %v691, %v739
        %v772 = vsub.f32 %v692, %v739
        %v773 = vsub.f32 %v693, %v742
        %v774 = vsub.f32 %v694, %v742
        %v775 = vmul.f32 %v743, 1.442695
        %v776 = vpow.pop %v775
        %v777 = vmul.f32 %v744, 1.442695
        %v778 = vpow.pop %v777
        %v779 = vmul.f32 %v745, 1.442695
        %v780 = vpow.pop %v779
        %v781 = vmul.f32 %v746, 1.442695
        %v782 = vpow.pop %v781
        %v783 = vmul.f32 %v747, 1.442695
        %v784 = vpow.pop %v783
        %v785 = vmul.f32 %v748, 1.442695
        %v786 = vpow.pop %v785
        %v787 = vmul.f32 %v749, 1.442695
        %v788 = vpow.pop %v787
        %v789 = vmul.f32 %v750, 1.442695
        %v790 = vpow.pop %v789
        %v791 = vmul.f32 %v751, 1.442695
        %v792 = vpow.pop %v791
        %v793 = vmul.f32 %v752, 1.442695
        %v794 = vpow.pop %v793
        %v795 = vmul.f32 %v753, 1.442695
        %v796 = vpow.pop %v795
        %v797 = vmul.f32 %v754, 1.442695
        %v798 = vpow.pop %v797
        %v799 = vmul.f32 %v755, 1.442695
        %v800 = vpow.pop %v799
        %v801 = vmul.f32 %v756, 1.442695
        %v802 = vpow.pop %v801
        %v803 = vmul.f32 %v757, 1.442695
        %v804 = vpow.pop %v803
        %v805 = vmul.f32 %v758, 1.442695
        %v806 = vpow.pop %v805
        %v807 = vmul.f32 %v759, 1.442695
        %v808 = vpow.pop %v807
        %v809 = vmul.f32 %v760, 1.442695
        %v810 = vpow.pop %v809
        %v811 = vmul.f32 %v761, 1.442695
        %v812 = vpow.pop %v811
        %v813 = vmul.f32 %v762, 1.442695
        %v814 = vpow.pop %v813
        %v815 = vmul.f32 %v763, 1.442695
        %v816 = vpow.pop %v815
        %v817 = vmul.f32 %v764, 1.442695
        %v818 = vpow.pop %v817
        %v819 = vmul.f32 %v765, 1.442695
        %v820 = vpow.pop %v819
        %v821 = vmul.f32 %v766, 1.442695
        %v822 = vpow.pop %v821
        %v823 = vmul.f32 %v767, 1.442695
        %v824 = vpow.pop %v823
        %v825 = vmul.f32 %v768, 1.442695
        %v826 = vpow.pop %v825
        %v827 = vmul.f32 %v769, 1.442695
        %v828 = vpow.pop %v827
        %v829 = vmul.f32 %v770, 1.442695
        %v830 = vpow.pop %v829
        %v831 = vmul.f32 %v771, 1.442695
        %v832 = vpow.pop %v831
        %v833 = vmul.f32 %v772, 1.442695
        %v834 = vpow.pop %v833
        %v835 = vmul.f32 %v773, 1.442695
        %v836 = vpow.pop %v835
        %v837 = vmul.f32 %v774, 1.442695
        %v838 = vpow.pop %v837
        %v839 = vld [vmem:[%s0] sm:$0xff]
        %v840 = vld [vmem:[%s0 + $0x8] sm:$0xff]
        %v841 = vld [vmem:[%s0 + $0x10] sm:$0xff]
        %v842 = vld [vmem:[%s0 + $0x18] sm:$0xff]
        %v843 = vld [vmem:[%s0 + $0x20] sm:$0xff]
        %v844 = vld [vmem:[%s0 + $0x28] sm:$0xff]
        %v845 = vld [vmem:[%s0 + $0x30] sm:$0xff]
        %v846 = vld [vmem:[%s0 + $0x38] sm:$0xff]
        %v847 = vld [vmem:[%s0 + $0x40] sm:$0xff]
        %v848 = vld [vmem:[%s0 + $0x48] sm:$0xff]
        %v849 = vld [vmem:[%s0 + $0x50] sm:$0xff]
        %v850 = vld [vmem:[%s0 + $0x58] sm:$0xff]
        %v851 = vld [vmem:[%s0 + $0x60] sm:$0xff]
        %v852 = vld [vmem:[%s0 + $0x68] sm:$0xff]
        %v853 = vld [vmem:[%s0 + $0x70] sm:$0xff]
        %v854 = vld [vmem:[%s0 + $0x78] sm:$0xff]
        %v855 = vld [vmem:[%s0 + $0x80] sm:$0xff]
        %v856 = vld [vmem:[%s0 + $0x88] sm:$0xff]
        %v857 = vld [vmem:[%s0 + $0x90] sm:$0xff]
        %v858 = vld [vmem:[%s0 + $0x98] sm:$0xff]
        %v859 = vld [vmem:[%s0 + $0xa0] sm:$0xff]
        %v860 = vld [vmem:[%s0 + $0xa8] sm:$0xff]
        %v861 = vld [vmem:[%s0 + $0xb0] sm:$0xff]
        %v862 = vld [vmem:[%s0 + $0xb8] sm:$0xff]
        %v863 = vld [vmem:[%s0 + $0xc0] sm:$0xff]
        %v864 = vld [vmem:[%s0 + $0xc8] sm:$0xff]
        %v865 = vld [vmem:[%s0 + $0xd0] sm:$0xff]
        %v866 = vld [vmem:[%s0 + $0xd8] sm:$0xff]
        %v867 = vld [vmem:[%s0 + $0xe0] sm:$0xff]
        %v868 = vld [vmem:[%s0 + $0xe8] sm:$0xff]
        %v869 = vld [vmem:[%s0 + $0xf0] sm:$0xff]
        %v870 = vld [vmem:[%s0 + $0xf8] sm:$0xff]
        %871 = vmatprep.subr.mxu0 0.0
        %872 = vmatpush1.msra.mxu0 %v839
        %873 = vmatprep.subr.mxu0 0.0
        %874 = vmatpush1.msra.mxu0 %v840
        %875 = vmatprep.subr.mxu0 0.0
        %876 = vmatpush1.msra.mxu0 %v841
        %877 = vmatprep.subr.mxu0 0.0
        %878 = vmatpush1.msra.mxu0 %v842
        %879 = vmatprep.subr.mxu0 0.0
        %880 = vmatpush1.msra.mxu0 %v843
        %881 = vmatprep.subr.mxu0 0.0
        %882 = vmatpush1.msra.mxu0 %v844
        %883 = vmatprep.subr.mxu0 0.0
        %884 = vmatpush1.msra.mxu0 %v845
        %885 = vmatprep.subr.mxu0 0.0
        %886 = vmatpush1.msra.mxu0 %v846
        %887 = vmatprep.subr.mxu0 0.0
        %888 = vmatpush1.msra.mxu0 %v847
        %889 = vmatprep.subr.mxu0 0.0
        %890 = vmatpush1.msra.mxu0 %v848
        %891 = vmatprep.subr.mxu0 0.0
        %892 = vmatpush1.msra.mxu0 %v849
        %893 = vmatprep.subr.mxu0 0.0
        %894 = vmatpush1.msra.mxu0 %v850
        %895 = vmatprep.subr.mxu0 0.0
        %896 = vmatpush1.msra.mxu0 %v851
        %897 = vmatprep.subr.mxu0 0.0
        %898 = vmatpush1.msra.mxu0 %v852
        %899 = vmatprep.subr.mxu0 0.0
        %900 = vmatpush1.msra.mxu0 %v853
        %901 = vmatprep.subr.mxu0 0.0
        %902 = vmatpush1.msra.mxu0 %v854
        %903 = vmatprep.subr.mxu0 0.0
        %904 = vmatpush1.msra.mxu0 %v855
        %905 = vmatprep.subr.mxu0 0.0
        %906 = vmatpush1.msra.mxu0 %v856
        %907 = vmatprep.subr.mxu0 0.0
        %908 = vmatpush1.msra.mxu0 %v857
        %909 = vmatprep.subr.mxu0 0.0
        %910 = vmatpush1.msra.mxu0 %v858
        %911 = vmatprep.subr.mxu0 0.0
        %912 = vmatpush1.msra.mxu0 %v859
        %913 = vmatprep.subr.mxu0 0.0
        %914 = vmatpush1.msra.mxu0 %v860
        %915 = vmatprep.subr.mxu0 0.0
        %916 = vmatpush1.msra.mxu0 %v861
        %917 = vmatprep.subr.mxu0 0.0
        %918 = vmatpush1.msra.mxu0 %v862
        %919 = vmatprep.subr.mxu0 0.0
        %920 = vmatpush1.msra.mxu0 %v863
        %921 = vmatprep.subr.mxu0 0.0
        %922 = vmatpush1.msra.mxu0 %v864
        %923 = vmatprep.subr.mxu0 0.0
        %924 = vmatpush1.msra.mxu0 %v865
        %925 = vmatprep.subr.mxu0 0.0
        %926 = vmatpush1.msra.mxu0 %v866
        %927 = vmatprep.subr.mxu0 0.0
        %928 = vmatpush1.msra.mxu0 %v867
        %929 = vmatprep.subr.mxu0 0.0
        %930 = vmatpush1.msra.mxu0 %v868
        %931 = vmatprep.subr.mxu0 0.0
        %932 = vmatpush1.msra.mxu0 %v869
        %933 = vmatprep.subr.mxu0 0.0
        %934 = vmatpush1.msra.mxu0 %v870
        %935 = vmatprep.mubr.f32.mxu0 %v778
        %936 = vmatmul.mubr.f32.gmra.mrb[0].mxu0 %v776
        %v937 = vpop.f32.mrb[0].mxu0
        %v938 = vadd.f32 0.0, %v937
        %v939 = vpop.f32.mrb[0].mxu0
        %940 = vmatprep.mubr.f32.mxu0 %v782
        %941 = vmatmul.mubr.f32.gmra.mrb[0].mxu0 %v780
        %v942 = vpop.f32.mrb[0].mxu0
        %v943 = vadd.f32 0.0, %v942
        %v944 = vpop.f32.mrb[0].mxu0
        %945 = vmatprep.mubr.f32.mxu0 %v786
        %946 = vmatmul.mubr.f32.gmra.mrb[0].mxu0 %v784
        %v947 = vpop.f32.mrb[0].mxu0
        %v948 = vadd.f32 0.0, %v947
        %v949 = vpop.f32.mrb[0].mxu0
        %950 = vmatprep.mubr.f32.mxu0 %v790
        %951 = vmatmul.mubr.f32.gmra.mrb[0].mxu0 %v788
        %v952 = vpop.f32.mrb[0].mxu0
        %v953 = vadd.f32 0.0, %v952
        %v954 = vpop.f32.mrb[0].mxu0
        %955 = vmatprep.mubr.f32.mxu0 %v794
        %956 = vmatmul.mubr.f32.gmra.mrb[0].mxu0 %v792
        %v957 = vpop.f32.mrb[0].mxu0
        %v958 = vadd.f32 0.0, %v957
        %v959 = vpop.f32.mrb[0].mxu0
        %960 = vmatprep.mubr.f32.mxu0 %v798
        %961 = vmatmul.mubr.f32.gmra.mrb[0].mxu0 %v796
        %v962 = vpop.f32.mrb[0].mxu0
        %v963 = vadd.f32 0.0, %v962
        %v964 = vpop.f32.mrb[0].mxu0
        %965 = vmatprep.mubr.f32.mxu0 %v802
        %966 = vmatmul.mubr.f32.gmra.mrb[0].mxu0 %v800
        %v967 = vpop.f32.mrb[0].mxu0
        %v968 = vadd.f32 0.0, %v967
        %v969 = vpop.f32.mrb[0].mxu0
        %970 = vmatprep.mubr.f32.mxu0 %v806
        %971 = vmatmul.mubr.f32.gmra.mrb[0].mxu0 %v804
        %v972 = vpop.f32.mrb[0].mxu0
        %v973 = vadd.f32 0.0, %v972
        %v974 = vpop.f32.mrb[0].mxu0
        %975 = vmatprep.mubr.f32.mxu0 %v810
        %976 = vmatmul.mubr.f32.gmra.mrb[0].mxu0 %v808
        %v977 = vpop.f32.mrb[0].mxu0
        %v978 = vadd.f32 0.0, %v977
        %v979 = vpop.f32.mrb[0].mxu0
        %980 = vmatprep.mubr.f32.mxu0 %v814
        %981 = vmatmul.mubr.f32.gmra.mrb[0].mxu0 %v812
        %v982 = vpop.f32.mrb[0].mxu0
        %v983 = vadd.f32 0.0, %v982
        %v984 = vpop.f32.mrb[0].mxu0
        %985 = vmatprep.mubr.f32.mxu0 %v818
        %986 = vmatmul.mubr.f32.gmra.mrb[0].mxu0 %v816
        %v987 = vpop.f32.mrb[0].mxu0
        %v988 = vadd.f32 0.0, %v987
        %v989 = vpop.f32.mrb[0].mxu0
        %990 = vmatprep.mubr.f32.mxu0 %v822
        %991 = vmatmul.mubr.f32.gmra.mrb[0].mxu0 %v820
        %v992 = vpop.f32.mrb[0].mxu0
        %v993 = vadd.f32 0.0, %v992
        %v994 = vpop.f32.mrb[0].mxu0
        %995 = vmatprep.mubr.f32.mxu0 %v826
        %996 = vmatmul.mubr.f32.gmra.mrb[0].mxu0 %v824
        %v997 = vpop.f32.mrb[0].mxu0
        %v998 = vadd.f32 0.0, %v997
        %v999 = vpop.f32.mrb[0].mxu0
        %1000 = vmatprep.mubr.f32.mxu0 %v830
        %1001 = vmatmul.mubr.f32.gmra.mrb[0].mxu0 %v828
        %v1002 = vpop.f32.mrb[0].mxu0
        %v1003 = vadd.f32 0.0, %v1002
        %v1004 = vpop.f32.mrb[0].mxu0
        %1005 = vmatprep.mubr.f32.mxu0 %v834
        %1006 = vmatmul.mubr.f32.gmra.mrb[0].mxu0 %v832
        %v1007 = vpop.f32.mrb[0].mxu0
        %v1008 = vadd.f32 0.0, %v1007
        %v1009 = vpop.f32.mrb[0].mxu0
        %1010 = vmatprep.mubr.f32.mxu0 %v838
        %1011 = vmatmul.mubr.f32.gmra.mrb[0].mxu0 %v836
        %v1012 = vpop.f32.mrb[0].mxu0
        %v1013 = vadd.f32 0.0, %v1012
        %v1014 = vpop.f32.mrb[0].mxu0
        %1015 = vdwg.mxu0
        %v1016 = vmax.f32 %v938, 1e-30
        %v1017 = vmax.f32 %v943, 1e-30
        %v1018 = vmax.f32 %v948, 1e-30
        %v1019 = vmax.f32 %v953, 1e-30
        %v1020 = vmax.f32 %v958, 1e-30
        %v1021 = vmax.f32 %v963, 1e-30
        %v1022 = vmax.f32 %v968, 1e-30
        %v1023 = vmax.f32 %v973, 1e-30
        %v1024 = vmax.f32 %v978, 1e-30
        %v1025 = vmax.f32 %v983, 1e-30
        %v1026 = vmax.f32 %v988, 1e-30
        %v1027 = vmax.f32 %v993, 1e-30
        %v1028 = vmax.f32 %v998, 1e-30
        %v1029 = vmax.f32 %v1003, 1e-30
        %v1030 = vmax.f32 %v1008, 1e-30
        %v1031 = vmax.f32 %v1013, 1e-30
        %v1032 = vrcp.pop %v1016
        %v1033 = vrcp.pop %v1017
        %v1034 = vrcp.pop %v1018
        %v1035 = vrcp.pop %v1019
        %v1036 = vrcp.pop %v1020
        %v1037 = vrcp.pop %v1021
        %v1038 = vrcp.pop %v1022
        %v1039 = vrcp.pop %v1023
        %v1040 = vrcp.pop %v1024
        %v1041 = vrcp.pop %v1025
        %v1042 = vrcp.pop %v1026
        %v1043 = vrcp.pop %v1027
        %v1044 = vrcp.pop %v1028
        %v1045 = vrcp.pop %v1029
        %v1046 = vrcp.pop %v1030
        %v1047 = vrcp.pop %v1031
        %1049 = vset.pattern.permute.xlu0 10
        %1050 = vperm.xlu0 %1049, %v1032
        %v1051 = vpop.permute.xlu0 %1050
        %1054 = vset.pattern.permute.xlu0 10
        %1055 = vperm.xlu0 %1054, %v1033
        %v1056 = vpop.permute.xlu0 %1055
        %1059 = vset.pattern.permute.xlu0 10
        %1060 = vperm.xlu0 %1059, %v1034
        %v1061 = vpop.permute.xlu0 %1060
        %1064 = vset.pattern.permute.xlu0 10
        %1065 = vperm.xlu0 %1064, %v1035
        %v1066 = vpop.permute.xlu0 %1065
        %1069 = vset.pattern.permute.xlu0 10
        %1070 = vperm.xlu0 %1069, %v1036
        %v1071 = vpop.permute.xlu0 %1070
        %1074 = vset.pattern.permute.xlu0 10
        %1075 = vperm.xlu0 %1074, %v1037
        %v1076 = vpop.permute.xlu0 %1075
        %1079 = vset.pattern.permute.xlu0 10
        %1080 = vperm.xlu0 %1079, %v1038
        %v1081 = vpop.permute.xlu0 %1080
        %1084 = vset.pattern.permute.xlu0 10
        %1085 = vperm.xlu0 %1084, %v1039
        %v1086 = vpop.permute.xlu0 %1085
        %1089 = vset.pattern.permute.xlu0 10
        %1090 = vperm.xlu0 %1089, %v1040
        %v1091 = vpop.permute.xlu0 %1090
        %1094 = vset.pattern.permute.xlu0 10
        %1095 = vperm.xlu0 %1094, %v1041
        %v1096 = vpop.permute.xlu0 %1095
        %1099 = vset.pattern.permute.xlu0 10
        %1100 = vperm.xlu0 %1099, %v1042
        %v1101 = vpop.permute.xlu0 %1100
        %1104 = vset.pattern.permute.xlu0 10
        %1105 = vperm.xlu0 %1104, %v1043
        %v1106 = vpop.permute.xlu0 %1105
        %1109 = vset.pattern.permute.xlu0 10
        %1110 = vperm.xlu0 %1109, %v1044
        %v1111 = vpop.permute.xlu0 %1110
        %1114 = vset.pattern.permute.xlu0 10
        %1115 = vperm.xlu0 %1114, %v1045
        %v1116 = vpop.permute.xlu0 %1115
        %1119 = vset.pattern.permute.xlu0 10
        %1120 = vperm.xlu0 %1119, %v1046
        %v1121 = vpop.permute.xlu0 %1120
        %1124 = vset.pattern.permute.xlu0 10
        %1125 = vperm.xlu0 %1124, %v1047
        %v1126 = vpop.permute.xlu0 %1125
        %v1128 = vmul.f32 %v938, %v1051
        %v1129 = vmul.f32 %v943, %v1056
        %v1130 = vmul.f32 %v948, %v1061
        %v1131 = vmul.f32 %v953, %v1066
        %v1132 = vmul.f32 %v958, %v1071
        %v1133 = vmul.f32 %v963, %v1076
        %v1134 = vmul.f32 %v968, %v1081
        %v1135 = vmul.f32 %v973, %v1086
        %v1136 = vmul.f32 %v978, %v1091
        %v1137 = vmul.f32 %v983, %v1096
        %v1138 = vmul.f32 %v988, %v1101
        %v1139 = vmul.f32 %v993, %v1106
        %v1140 = vmul.f32 %v998, %v1111
        %v1141 = vmul.f32 %v1003, %v1116
        %v1142 = vmul.f32 %v1008, %v1121
        %v1143 = vmul.f32 %v1013, %v1126
        %1144 = vst [vmem:[%s232] sm:$0xff] %v1128
        %1145 = vst [vmem:[%s232 + $0x8] sm:$0xff] %v1129
        %1146 = vst [vmem:[%s232 + $0x10] sm:$0xff] %v1130
        %1147 = vst [vmem:[%s232 + $0x18] sm:$0xff] %v1131
        %1148 = vst [vmem:[%s232 + $0x20] sm:$0xff] %v1132
        %1149 = vst [vmem:[%s232 + $0x28] sm:$0xff] %v1133
        %1150 = vst [vmem:[%s232 + $0x30] sm:$0xff] %v1134
        %1151 = vst [vmem:[%s232 + $0x38] sm:$0xff] %v1135
        %1152 = vst [vmem:[%s232 + $0x40] sm:$0xff] %v1136
        %1153 = vst [vmem:[%s232 + $0x48] sm:$0xff] %v1137
        %1154 = vst [vmem:[%s232 + $0x50] sm:$0xff] %v1138
        %1155 = vst [vmem:[%s232 + $0x58] sm:$0xff] %v1139
        %1156 = vst [vmem:[%s232 + $0x60] sm:$0xff] %v1140
        %1157 = vst [vmem:[%s232 + $0x68] sm:$0xff] %v1141
        %1158 = vst [vmem:[%s232 + $0x70] sm:$0xff] %v1142
        %1159 = vst [vmem:[%s232 + $0x78] sm:$0xff] %v1143
        %s1160 = sand.u32 %s123, 1
        %s1161 = scalar_lea.sflag [#allocation4], %s1160
        %s1162 = sand.u32 %s123, 1
        %s1163 = smul.addr %s1162, 128
        %s1164 = scalar_lea.vmem [#allocation5], %s1163
        // Predicated region
        $region41: #{tpu_custom_call.1} parent=35 // pred_check
          %p1165 = pneg %p133
        $region42: #{tpu_custom_call.1} parent=35 // pred_check_branch
          %1167 = sbr.rel (%p1165) target = $region44
        $region43: #{tpu_custom_call.1} parent=35 // pred_region
          %s1168 = smul.u32 16, %s21
          %s1170 = ssub.s32 2048, 2048
          %1171 = vsyncadd %s1161, %s1170
          %s1172 = smul.addr %s1168, 128
          %s1173 = scalar_lea.hbm %s4, %s1172
          %s1174 = sshll.u32 %s1164, 4
          %s1175 = int_to_ptr.vmem [resolvable:$true] %s1174
          %1180 = dma.vmem_to_hbm [thread:$0]  %s1175, 2048, %s1173, %s1161, 128, 128, 8
        $region44: #{tpu_custom_call.1} parent=35 // pred_fallthru
          _
      $region36: #{tpu_custom_call.1} parent=5 // pred_fallthru
        _
      %p1181 = scmp.le.s32.totalorder 2, %s16
      // Predicated region
      $region45: #{tpu_custom_call.1} parent=5 // pred_check
        %p1182 = pneg %p1181
      $region46: #{tpu_custom_call.1} parent=5 // pred_check_branch
        %1184 = sbr.rel (%p1182) target = $region48
      $region47: #{tpu_custom_call.1} parent=5 // pred_region
        %s1185 = ssub.s32 %s16, 2
        // Predicated region
        $region49: #{tpu_custom_call.1} parent=47 // pred_check
          %p1186 = pneg %p139
        $region50: #{tpu_custom_call.1} parent=47 // pred_check_branch
          %1188 = sbr.rel (%p1186) target = $region52
        $region51: #{tpu_custom_call.1} parent=47 // pred_region
          %s1189 = sand.u32 %s124, 1
          %s1190 = scalar_lea.sflag [#allocation4], %s1189
          %s1191 = sand.u32 %s124, 1
          %s1192 = smul.addr %s1191, 128
          %s1193 = scalar_lea.vmem [#allocation5], %s1192
          %1194 = dma.done %s1190, 2048
        $region52: #{tpu_custom_call.1} parent=47 // pred_fallthru
          _
      $region48: #{tpu_custom_call.1} parent=5 // pred_fallthru
        _
    $region6: #{tpu_custom_call.1} parent=1 // loop_footer
      %s20 = sadd.s32 1, %s16
    $region7: #{tpu_custom_call.1} parent=1 // loop_footer_branch
      %15 = sbr.rel target = $region3
    $region8: #{tpu_custom_call.1} parent=1 // loop_exit
      _
    %1195 = vsyncpa [#allocation3], 1
    %s1196 = scalar_lea.sflag [#allocation3], 1
    %1197 = vsyncpa %s1196, 1
    %1198 = vsyncpa [#allocation4], 1
    %s1199 = scalar_lea.sflag [#allocation4], 1
    %1200 = vsyncpa %s1199, 1

</llo_original>
